<compile_context>
chip_gen: v7x
topology: tpu7x:2x2x1
jax: 0.10.0
libtpu: 0.0.40
codegen_flags: <defaults>
</compile_context>

<pallas_src>
import functools

import numpy as np
import jax
import jax.numpy as jnp
from jax.experimental import pallas as pl
from jax.experimental.pallas import tpu as pltpu


# --------------------------------------------------------------------------- #
# Kernel
# --------------------------------------------------------------------------- #
def pam_kernel(x_ref, wqk_ref, eb_ref, xp_ref, wg_ref, bg_ref, o_ref, *, exp_dtype):
    # x_ref  : (TQ, Cp) bf16  query-row tile of the full-res feature map
    # wqk_ref: (Cp, Np) bf16  folded query*key weights (wq @ k^T), batch-resident
    # eb_ref : (1,  Np) f32   folded energy bias       (bq @ k^T), batch-resident
    # xp_ref : (Np, Cp) bf16  pooled features (value path), batch-resident
    # wg_ref : (1,  Cp) f32   gate 1x1-conv weight (row vector)
    # bg_ref : (1,  1)  f32   gate bias
    x_bf = x_ref[...]                                                  # (TQ, Cp) bf16
    x_f32 = x_bf.astype(jnp.float32)                                   # needed for blend

    # energy[n, m] = x_n . (wq @ k_m) + bq . k_m
    # Single MXU GEMM contracting the full Cp channels (vs. the old Kd=8-deep
    # contraction + separate projection GEMM + lane slices).
    energy = jnp.dot(x_bf, wqk_ref[...],
                     preferred_element_type=jnp.float32) + eb_ref[...]  # (TQ, Np) f32

    # Row-wise softmax over Np, normalization deferred to the output scale.
    e_max = jnp.max(energy, axis=-1, keepdims=True)                    # (TQ, 1) f32
    p = jnp.exp((energy - e_max).astype(exp_dtype))                    # bf16 on v6e/v7x
    row_sum = jnp.sum(p, axis=-1, keepdims=True, dtype=jnp.float32)    # f32 accumulate

    # out[n, c] = sum_m p[n, m] * xp[m, c]  (bf16 MXU, f32 accumulate),
    # scaled afterwards by 1/row_sum on the EUP (approx reciprocal, ~free).
    out = jnp.dot(p.astype(jnp.bfloat16), xp_ref[...],
                  preferred_element_type=jnp.float32)                  # (TQ, Cp) f32
    out = out * pl.reciprocal(row_sum, approx=True)

    # Sigmoid gate: VPU multiply + XLU lane-reduce against the (1, Cp) weight
    # row — avoids a width-1 MXU matmul and any lane slicing.
    g_logit = jnp.sum(x_f32 * wg_ref[...], axis=-1, keepdims=True) + bg_ref[...]
    g = jax.nn.sigmoid(g_logit)                                        # (TQ, 1) f32

    # Sigmoid-gate blend: (1 - g) * out + g * x
    o_ref[...] = ((1.0 - g) * out + g * x_f32).astype(o_ref.dtype)


# --------------------------------------------------------------------------- #
# Hardware-aware sizing helpers
# --------------------------------------------------------------------------- #
def _is_v6_or_newer():
    """v6e / v7x: 256-wide MXU output, bf16 VPU/EUP paths."""
    try:
        kind = jax.devices()[0].device_kind.lower()
    except Exception:
        return False
    return any(t in kind for t in ("v6", "v7", "7x"))


def _vmem_capacity_bytes():
    try:
        return int(pltpu.get_tpu_info().vmem_capacity_bytes)
    except Exception:
        # Conservative fallback: v7x physical VMEM per TensorCore.
        return 64 * 1024 * 1024


def _pick_tq(N, Np, Cp, budget_bytes):
    """Largest sublane-aligned query tile that divides N and whose VMEM
    footprint (double-buffered blocks + f32 intermediates) fits the budget."""
    resident = 2 * (Cp * Np * 2      # wqk    (bf16), double-buffered by the pipeline
                    + Np * Cp * 2    # xp     (bf16)
                    + Np * 4         # e_bias (f32)
                    + Cp * 4 + 4)    # wg, bg

    def cost(tq):
        return (resident
                + 2 * tq * Cp * 2    # x tile (bf16), double-buffered
                + 2 * tq * Cp * 4    # out tile (f32), double-buffered
                + tq * Np * 4        # energy (f32)
                + tq * Np * 4        # p (f32 worst case)
                + 2 * tq * Cp * 4)   # f32 temporaries (x_f32, scaled out)

    for step in (8, 4, 2, 1):        # prefer sublane-aligned (multiple of 8)
        cands = [t for t in range(step, min(N, 1024) + 1, step) if N % t == 0]
        if cands:
            fitting = [t for t in cands if cost(t) <= budget_bytes]
            # TODO(synk): if even the smallest tile overflows (very large Np),
            # switch to a flash-style Np-chunked inner loop with m/l/acc
            # scratch instead of relying on compiler spilling.
            return max(fitting) if fitting else min(cands)
    return N


# --------------------------------------------------------------------------- #
# Wrappers
# --------------------------------------------------------------------------- #
def pam_forward_nhwc(x_nhwc, params, *, tq=None):
    """Channels-last entry point. x_nhwc: (B, H, W, C) f32 -> (B, H, W, C)."""
    B, H, W, C = x_nhwc.shape
    hp, wp = H // 2, W // 2
    N, Np = H * W, hp * wp

    wq, bq = params["wq"], params["bq"]
    wk, bk = params["wk"], params["bk"]
    wg, bg = params["wg"], params["bg"]

    # MaxPool2d(kernel_size=2) in NHWC (floors odd H/W like PyTorch).
    xp_nhwc = jnp.max(
        x_nhwc[:, :2 * hp, :2 * wp, :].reshape(B, hp, 2, wp, 2, C), axis=(2, 4))

    x_cl = x_nhwc.reshape(B, N, C)
    xp_cl = xp_nhwc.reshape(B, Np, C)

    # Lane-dense channel padding: multiple of 128, or 256 on v6e/v7x when the
    # real channel count is large enough that this is not pure padding.
    lane = 256 if (C >= 256 and _is_v6_or_newer()) else 128
    Cp = ((C + lane - 1) // lane) * lane
    pad_c = Cp - C

    # Keys (tiny GEMM, once per call), then FOLD the query projection in:
    #   energy = (x@wq + bq) @ k^T  ==  x @ (wq @ k^T) + (bq @ k^T)
    k = jnp.einsum("bmc,ck->bmk", xp_cl, wk) + bk                     # (B, Np, Kd) f32
    wq_p = jnp.pad(wq, ((0, pad_c), (0, 0))) if pad_c else wq         # (Cp, Kd)
    wqk = jnp.einsum("ck,bmk->bcm", wq_p, k).astype(jnp.bfloat16)     # (B, Cp, Np)
    ebias = jnp.einsum("ok,bmk->bom", bq, k)                          # (B, 1, Np) f32

    if pad_c:
        x_in = jnp.pad(x_cl, ((0, 0), (0, 0), (0, pad_c)))
        xp_in = jnp.pad(xp_cl, ((0, 0), (0, 0), (0, pad_c)))
        wg_t = jnp.pad(wg.T, ((0, 0), (0, pad_c)))                    # (1, Cp)
    else:
        x_in, xp_in, wg_t = x_cl, xp_cl, wg.T
    x_in = x_in.astype(jnp.bfloat16)    # halves query-tile DMA; blend re-expands to f32
    xp_in = xp_in.astype(jnp.bfloat16)  # value path (bf16 MXU, f32 accumulate)
    bg_b = bg.reshape(1, 1)

    # Generation-/shape-aware VMEM sizing.
    vmem_limit = int(_vmem_capacity_bytes() * 0.75)   # ~48 MiB v7x, ~96 MiB v5e/v6e
    if tq is None:
        tq = _pick_tq(N, Np, Cp, int(vmem_limit * 0.8))
    n_tiles = N // tq

    # bf16 exp only where the EUP has a bf16 path (v6e/v7x); f32 otherwise.
    exp_dtype = jnp.bfloat16 if _is_v6_or_newer() else jnp.float32
    kernel = functools.partial(pam_kernel, exp_dtype=exp_dtype)

    out_flat = pl.pallas_call(
        kernel,
        out_shape=jax.ShapeDtypeStruct((B, N, Cp), x_nhwc.dtype),
        grid_spec=pltpu.PrefetchScalarGridSpec(
            num_scalar_prefetch=0,
            grid=(B, n_tiles),
            in_specs=[
                # query-row tile of x (batch dim squeezed -> kernel sees 2-D)
                pl.BlockSpec((None, tq, Cp), lambda b, t: (b, t, 0)),
                # folded keys: constant along t -> VMEM-resident per batch
                # (note: batch-resident blocks are left at the default buffer
                #  count; the TQ budget above already accounts for it)
                pl.BlockSpec((None, Cp, Np), lambda b, t: (b, 0, 0)),
                pl.BlockSpec((None, 1, Np), lambda b, t: (b, 0, 0)),
                # pooled values: constant along t -> VMEM-resident per batch
                pl.BlockSpec((None, Np, Cp), lambda b, t: (b, 0, 0)),
                # gate weight row / bias (whole arrays)
                pl.BlockSpec((1, Cp), lambda b, t: (0, 0)),
                pl.BlockSpec((1, 1), lambda b, t: (0, 0)),
            ],
            out_specs=pl.BlockSpec((None, tq, Cp), lambda b, t: (b, t, 0)),
        ),
        compiler_params=pltpu.CompilerParams(
            dimension_semantics=("parallel", "parallel"),
            vmem_limit_bytes=vmem_limit),
    )(x_in, wqk, ebias, xp_in, wg_t, bg_b)

    # Drop channel padding; stays channels-last for NHWC callers.
    return out_flat[:, :, :C].reshape(B, H, W, C)


def pam_forward(x, params, *, tq=None):
    """NCHW entry point matching the PyTorch module. x: (B, C, H, W) f32."""
    # NCHW callers pay one transpose each way; NHWC callers should use
    # pam_forward_nhwc directly and skip both full-tensor HBM passes.
    x_nhwc = jnp.transpose(x, (0, 2, 3, 1))
    out_nhwc = pam_forward_nhwc(x_nhwc, params, tq=tq)
    return jnp.transpose(out_nhwc, (0, 3, 1, 2))


# --------------------------------------------------------------------------- #
# Pure-JAX reference (mirrors the PyTorch forward)
# --------------------------------------------------------------------------- #
def pam_reference(x, params):
    B, C, H, W = x.shape
    hp, wp = H // 2, W // 2
    xp = jnp.max(x.reshape(B, C, hp, 2, wp, 2), axis=(3, 5))
    x_flat = jnp.transpose(x, (0, 2, 3, 1)).reshape(B, H * W, C)
    xp_flat = jnp.transpose(xp, (0, 2, 3, 1)).reshape(B, hp * wp, C)
    q = x_flat @ params["wq"] + params["bq"]
    k = xp_flat @ params["wk"] + params["bk"]
    energy = jnp.einsum("bnk,bmk->bnm", q, k)
    attn = jax.nn.softmax(energy, axis=-1)
    out = jnp.einsum("bnm,bmc->bnc", attn, xp_flat)
    g = jax.nn.sigmoid(x_flat @ params["wg"] + params["bg"])
    res = (1.0 - g) * out + g * x_flat
    return jnp.transpose(res.reshape(B, H, W, C), (0, 3, 1, 2))


if __name__ == "__main__":
    B, C, H, W = 2, 4, 16, 16
    key_dim = 8  # value_dim / out_dim are unused in the PyTorch forward path.

    key = jax.random.PRNGKey(0)
    kx, kq, kbq, kk, kbk, kg, kbg = jax.random.split(key, 7)

    x = jax.random.normal(kx, (B, C, H, W), dtype=jnp.float32)

    # Deterministic parameter init (1x1 conv weights stored as (Cin, Cout)).
    params = {
        "wq": 0.1 * jax.random.normal(kq, (C, key_dim), dtype=jnp.float32),
        "bq": 0.1 * jax.random.normal(kbq, (1, key_dim), dtype=jnp.float32),
        "wk": 0.1 * jax.random.normal(kk, (C, key_dim), dtype=jnp.float32),
        "bk": 0.1 * jax.random.normal(kbk, (1, key_dim), dtype=jnp.float32),
        "wg": 0.1 * jax.random.normal(kg, (C, 1), dtype=jnp.float32),
        "bg": 0.1 * jax.random.normal(kbg, (1, 1), dtype=jnp.float32),
    }

    out = jax.block_until_ready(pam_forward(x, params))
    ref = jax.block_until_ready(pam_reference(x, params))

    assert out.shape == (B, C, H, W)
    # Tolerance loosened vs. pure-f32: the folded energy GEMM and value GEMM
    # use bf16 operands (f32 accumulation), exp may run in bf16 on v6e/v7x,
    # and the softmax denominator uses the EUP approximate reciprocal.
    np.testing.assert_allclose(np.asarray(out), np.asarray(ref),
                               rtol=2e-2, atol=2e-2)
    print("KERNEL_OK")
</pallas_src>

<mosaic_0001>
module attributes {stable_mosaic.version = 11 : i64} {
  func.func @pam_kernel(%arg0: i32, %arg1: i32, %arg2: memref<1x256x128xbf16, #tpu.memory_space<vmem>>, %arg3: memref<1x128x64xbf16, #tpu.memory_space<vmem>>, %arg4: memref<1x1x64xf32, #tpu.memory_space<vmem>>, %arg5: memref<1x64x128xbf16, #tpu.memory_space<vmem>>, %arg6: memref<1x128xf32, #tpu.memory_space<vmem>>, %arg7: memref<1x1xf32, #tpu.memory_space<vmem>>, %arg8: memref<1x256x128xf32, #tpu.memory_space<vmem>>) attributes {dimension_semantics = [#tpu.dimension_semantics<parallel>, #tpu.dimension_semantics<parallel>], iteration_bounds = array<i64: 2, 1>, scalar_prefetch = 0 : i64, scratch_operands = 0 : i64, tpu.core_type = #tpu.core_type<tc>, window_params = [{transform_indices = @transform_0, window_bounds = array<i64: 1, 256, 128>}, {transform_indices = @transform_1, window_bounds = array<i64: 1, 128, 64>}, {transform_indices = @transform_2, window_bounds = array<i64: 1, 1, 64>}, {transform_indices = @transform_3, window_bounds = array<i64: 1, 64, 128>}, {pipeline_mode = #tpu.pipeline_mode<synchronous>, transform_indices = @transform_4, window_bounds = array<i64: 1, 128>}, {pipeline_mode = #tpu.pipeline_mode<synchronous>, transform_indices = @transform_5, window_bounds = array<i64: 1, 1>}, {transform_indices = @transform_6, window_bounds = array<i64: 1, 256, 128>}]} {
    %c0 = arith.constant 0 : index
    %c0_0 = arith.constant 0 : index
    %c0_1 = arith.constant 0 : index
    %0 = vector.load %arg2[%c0, %c0_0, %c0_1] : memref<1x256x128xbf16, #tpu.memory_space<vmem>>, vector<1x256x128xbf16>
    %1 = vector.shape_cast %0 : vector<1x256x128xbf16> to vector<256x128xbf16>
    %2 = arith.extf %1 : vector<256x128xbf16> to vector<256x128xf32>
    %c0_2 = arith.constant 0 : index
    %c0_3 = arith.constant 0 : index
    %c0_4 = arith.constant 0 : index
    %3 = vector.load %arg3[%c0_2, %c0_3, %c0_4] : memref<1x128x64xbf16, #tpu.memory_space<vmem>>, vector<1x128x64xbf16>
    %4 = vector.shape_cast %3 : vector<1x128x64xbf16> to vector<128x64xbf16>
    %cst = arith.constant dense<0.000000e+00> : vector<256x64xf32>
    %5 = tpu.matmul %1, %4, %cst {dimension_numbers = #tpu.dot_dimension_numbers<[1], [0], [0], [1], [0, 0, 1, 1], [], []>} : vector<256x128xbf16>, vector<128x64xbf16>, vector<256x64xf32> -> vector<256x64xf32>
    %c0_5 = arith.constant 0 : index
    %c0_6 = arith.constant 0 : index
    %c0_7 = arith.constant 0 : index
    %6 = vector.load %arg4[%c0_5, %c0_6, %c0_7] : memref<1x1x64xf32, #tpu.memory_space<vmem>>, vector<1x1x64xf32>
    %7 = vector.shape_cast %6 : vector<1x1x64xf32> to vector<1x64xf32>
    %8 = vector.broadcast %7 : vector<1x64xf32> to vector<256x64xf32>
    %9 = arith.addf %5, %8 : vector<256x64xf32>
    %cst_8 = arith.constant dense<0xFF800000> : vector<256xf32>
    %10 = vector.multi_reduction <maximumf>, %9, %cst_8 [1] : vector<256x64xf32> to vector<256xf32>
    %11 = vector.shape_cast %10 : vector<256xf32> to vector<256x1xf32>
    %12 = vector.broadcast %11 : vector<256x1xf32> to vector<256x64xf32>
    %13 = arith.subf %9, %12 : vector<256x64xf32>
    %14 = math.exp %13 : vector<256x64xf32>
    %cst_9 = arith.constant dense<0.000000e+00> : vector<256xf32>
    %15 = vector.multi_reduction <add>, %14, %cst_9 [1] : vector<256x64xf32> to vector<256xf32>
    %16 = vector.shape_cast %15 : vector<256xf32> to vector<256x1xf32>
    %17 = arith.truncf %14 : vector<256x64xf32> to vector<256x64xbf16>
    %c0_10 = arith.constant 0 : index
    %c0_11 = arith.constant 0 : index
    %c0_12 = arith.constant 0 : index
    %18 = vector.load %arg5[%c0_10, %c0_11, %c0_12] : memref<1x64x128xbf16, #tpu.memory_space<vmem>>, vector<1x64x128xbf16>
    %19 = vector.shape_cast %18 : vector<1x64x128xbf16> to vector<64x128xbf16>
    %cst_13 = arith.constant dense<0.000000e+00> : vector<256x128xf32>
    %20 = tpu.matmul %17, %19, %cst_13 {dimension_numbers = #tpu.dot_dimension_numbers<[1], [0], [0], [1], [0, 0, 1, 1], [], []>} : vector<256x64xbf16>, vector<64x128xbf16>, vector<256x128xf32> -> vector<256x128xf32>
    %21 = tpu.reciprocal %16 {approx = true} : vector<256x1xf32> -> vector<256x1xf32>
    %22 = vector.broadcast %21 : vector<256x1xf32> to vector<256x128xf32>
    %23 = arith.mulf %20, %22 : vector<256x128xf32>
    %c0_14 = arith.constant 0 : index
    %c0_15 = arith.constant 0 : index
    %24 = vector.load %arg6[%c0_14, %c0_15] : memref<1x128xf32, #tpu.memory_space<vmem>>, vector<1x128xf32>
    %25 = vector.broadcast %24 : vector<1x128xf32> to vector<256x128xf32>
    %26 = arith.mulf %2, %25 : vector<256x128xf32>
    %cst_16 = arith.constant dense<0.000000e+00> : vector<256xf32>
    %27 = vector.multi_reduction <add>, %26, %cst_16 [1] : vector<256x128xf32> to vector<256xf32>
    %28 = vector.shape_cast %27 : vector<256xf32> to vector<256x1xf32>
    %c0_17 = arith.constant 0 : index
    %c0_18 = arith.constant 0 : index
    %29 = vector.load %arg7[%c0_17, %c0_18] : memref<1x1xf32, #tpu.memory_space<vmem>>, vector<1x1xf32>
    %30 = vector.broadcast %29 : vector<1x1xf32> to vector<256x1xf32>
    %31 = arith.addf %28, %30 : vector<256x1xf32>
    %32 = arith.negf %31 : vector<256x1xf32>
    %33 = math.exp %32 : vector<256x1xf32>
    %cst_19 = arith.constant 1.000000e+00 : f32
    %34 = vector.broadcast %cst_19 : f32 to vector<256x1xf32>
    %35 = arith.addf %34, %33 : vector<256x1xf32>
    %36 = arith.divf %34, %35 : vector<256x1xf32>
    %cst_20 = arith.constant 1.000000e+00 : f32
    %37 = vector.broadcast %cst_20 : f32 to vector<256x1xf32>
    %38 = arith.subf %37, %36 : vector<256x1xf32>
    %39 = vector.broadcast %38 : vector<256x1xf32> to vector<256x128xf32>
    %40 = arith.mulf %39, %23 : vector<256x128xf32>
    %41 = vector.broadcast %36 : vector<256x1xf32> to vector<256x128xf32>
    %42 = arith.mulf %41, %2 : vector<256x128xf32>
    %43 = arith.addf %40, %42 : vector<256x128xf32>
    %c0_21 = arith.constant 0 : index
    %c0_22 = arith.constant 0 : index
    %c0_23 = arith.constant 0 : index
    %44 = vector.load %arg8[%c0_21, %c0_22, %c0_23] : memref<1x256x128xf32, #tpu.memory_space<vmem>>, vector<1x256x128xf32>
    %45 = vector.shape_cast %44 : vector<1x256x128xf32> to vector<256x128xf32>
    %46 = vector.shape_cast %43 : vector<256x128xf32> to vector<1x256x128xf32>
    tpu.vector_store %arg8[%c0_21, %c0_22, %c0_23], %46 {strides = array<i32>} : memref<1x256x128xf32, #tpu.memory_space<vmem>>, vector<1x256x128xf32>,
    return
  }
  func.func @transform_0(%arg0: i32, %arg1: i32) -> (i32, i32, i32) {
    %c0_i32 = arith.constant 0 : i32
    %c0_i32_0 = arith.constant 0 : i32
    return %arg0, %arg1, %c0_i32 : i32, i32, i32
  }
  func.func @transform_1(%arg0: i32, %arg1: i32) -> (i32, i32, i32) {
    %c0_i32 = arith.constant 0 : i32
    %c0_i32_0 = arith.constant 0 : i32
    %c0_i32_1 = arith.constant 0 : i32
    return %arg0, %c0_i32, %c0_i32_0 : i32, i32, i32
  }
  func.func @transform_2(%arg0: i32, %arg1: i32) -> (i32, i32, i32) {
    %c0_i32 = arith.constant 0 : i32
    %c0_i32_0 = arith.constant 0 : i32
    %c0_i32_1 = arith.constant 0 : i32
    return %arg0, %c0_i32, %c0_i32_0 : i32, i32, i32
  }
  func.func @transform_3(%arg0: i32, %arg1: i32) -> (i32, i32, i32) {
    %c0_i32 = arith.constant 0 : i32
    %c0_i32_0 = arith.constant 0 : i32
    %c0_i32_1 = arith.constant 0 : i32
    return %arg0, %c0_i32, %c0_i32_0 : i32, i32, i32
  }
  func.func @transform_4(%arg0: i32, %arg1: i32) -> (i32, i32) {
    %c0_i32 = arith.constant 0 : i32
    %c0_i32_0 = arith.constant 0 : i32
    %c0_i32_1 = arith.constant 0 : i32
    return %c0_i32, %c0_i32_0 : i32, i32
  }
  func.func @transform_5(%arg0: i32, %arg1: i32) -> (i32, i32) {
    %c0_i32 = arith.constant 0 : i32
    %c0_i32_0 = arith.constant 0 : i32
    %c0_i32_1 = arith.constant 0 : i32
    return %c0_i32, %c0_i32_0 : i32, i32
  }
  func.func @transform_6(%arg0: i32, %arg1: i32) -> (i32, i32, i32) {
    %c0_i32 = arith.constant 0 : i32
    %c0_i32_0 = arith.constant 0 : i32
    return %arg0, %arg1, %c0_i32 : i32, i32, i32
  }
}

</mosaic_0001>

<llo_original>
// kernel: tpu_custom_call.1
$region0: #{tpu_custom_call.1}
  #allocation0 [shape = 'u32[]', space=smem, size = 0x4, offset = 0x4, fixed_abs, tag = 'smem constant byte address 0x4 - core index']
  #allocation1 [shape = 'u32[144,128]{1,0:T(1,128)}', space=vmem, size = 0x12000, scoped, tag = 'internal scratch']
  #allocation2 [shape = 'f32[1,1]{1,0:T(1,128)S(1)}', space=vmem, size = 0x200, scoped, tag = 'scoped memory for tpu_custom_call.1']
  %s0 = inlined_call_operand.hbm [shape: bf16[2,256,128], index: 0, kind: input, shape index: {}]
  %s1 = inlined_call_operand.vmem [shape: bf16[2,128,64], index: 1, kind: input, shape index: {}]
  %s2 = inlined_call_operand.vmem [shape: f32[2,1,64], index: 2, kind: input, shape index: {}]
  %s3 = inlined_call_operand.vmem [shape: bf16[2,64,128], index: 3, kind: input, shape index: {}]
  %s4 = inlined_call_operand.vmem [shape: f32[1,128], index: 4, kind: input, shape index: {}]
  %s5 = inlined_call_operand.<no memory space> [shape: f32[1,1], index: 5, kind: input, shape index: {}]
  %s6 = inlined_call_operand.hbm [shape: f32[2,256,128], index: 6, kind: output, shape index: {}]
  %s7 = sld [smem:[#allocation0]]
  $region61: #{tpu_custom_call.1} parent=0
    _
  %s9 = ssub.s32 1, %s7
  %s10 = scalar_select 0, %s9, %s7
  %v11 = vstv %s5
  %12 = vst [vmem:[#allocation2] sm:$0x1] %v11
  $region1: #{tpu_custom_call.1} parent=0
    #allocation3 [shape = 'u8[131072]{0}', space=vmem, size = 0x20000, scoped, tag = 'input window, operand 0']
    #allocation4 [shape = 's32[2]{0}', space=sflag, size = 0x8, scoped, tag = 'scoped memory for tpu_custom_call.1']
    #allocation5 [shape = 's32[2]{0}', space=sflag, size = 0x8, scoped, tag = 'scoped memory for tpu_custom_call.1']
    #allocation6 [shape = 'u8[262144]{0}', space=vmem, size = 0x40000, scoped, tag = 'output window, operand 0']
    %13 = vsyncpa [#allocation4], 0
    %s14 = scalar_lea.sflag [#allocation4], 1
    %15 = vsyncpa %s14, 0
    %16 = vsyncpa [#allocation5], 0
    %s17 = scalar_lea.sflag [#allocation5], 1
    %18 = vsyncpa %s17, 0
    loop: start=0, step=1, limit=4
    $region2: #{tpu_custom_call.1} parent=1 // loop_pre_header
      _
    $region3: #{tpu_custom_call.1} parent=1 // loop_header
      %s20 = sphi 0, %s24
      %p21 = scmp.ge.s32.totalorder %s20, 4
      %s27 = sphi 0, %s39
      %s28 = sphi 0, %s35
      %s29 = sphi 0, %s27
      %s30 = sphi 0, %s28
      %s31 = sphi 0, %s29
      %s32 = sphi 0, %s30
      %s44 = sphi 0, %s46
      %s47 = sphi 0, %s44
      %s48 = sphi 0, %s47
      %s64 = sphi 0, %s48
      %s70 = sphi 0, %s72
      %s73 = sphi 0, %s70
      %s74 = sphi 0, %s73
      %s90 = sphi 0, %s74
      %s96 = sphi 0, %s98
      %s99 = sphi 0, %s96
      %s100 = sphi 0, %s99
      %s116 = sphi 0, %s100
      %s122 = sphi 0, %s124
      %s125 = sphi 0, %s122
      %s126 = sphi 0, %s125
      %s142 = sphi 0, %s126
      %s146 = sphi 0, %s146
      %s148 = sphi 0, %s146
      %s149 = sphi 0, %s148
      %s163 = sphi 0, %s149
      %s167 = sphi 0, %s167
      %s169 = sphi 0, %s167
      %s170 = sphi 0, %s169
      %s184 = sphi 0, %s170
      %s192 = sphi 0, %s194
      %s195 = sphi 0, %s192
      %s196 = sphi 0, %s195
      %s212 = sphi 0, %s196
    $region4: #{tpu_custom_call.1} parent=1 // loop_header_branch
      %23 = sbr.rel (%p21) target = $region8
    $region5: #{tpu_custom_call.1} parent=1 // loop_body
      %s25 = ssub.s32 %s20, 1
      %s26 = ssub.s32 %s20, 2
      %s33 = sadd.s32 1, %s28
      %p34 = scmp.ge.s32.totalorder %s33, 1
      %s35 = scalar_select %p34, 0, %s33
      %s36 = sadd.s32 1, %s27
      %s37 = scalar_select %p34, %s36, %s27
      %p38 = scmp.ge.s32.totalorder %s37, 2
      %s39 = scalar_select %p38, 0, %s37
      %s40 = ssub.s32 %s27, %s39
      %s41 = ssub.s32 %s28, %s35
      %s42 = sor.u32 %s40, %s41
      %p43 = scmp.eq.s32.totalorder %s42, 0
      %s45 = sadd.s32 %s44, 1
      %s46 = scalar_select %p43, %s44, %s45
      %p49 = pneg %p43
      %p50 = scmp.eq.s32.totalorder %s20, 1
      %p51 = por %p49, %p50
      %p52 = scmp.ne.s32.totalorder %s44, %s47
      %p53 = scmp.eq.s32.totalorder %s20, 0
      %p54 = por %p52, %p53
      %p55 = scmp.ne.s32.totalorder %s44, %s47
      %p56 = scmp.eq.s32.totalorder %s25, 1
      %p57 = por %p55, %p56
      %p58 = scmp.ne.s32.totalorder %s47, %s48
      %p59 = scmp.eq.s32.totalorder %s25, 0
      %p60 = por %p58, %p59
      %p61 = scmp.ne.s32.totalorder %s47, %s48
      %p62 = scmp.eq.s32.totalorder %s26, 1
      %p63 = por %p61, %p62
      %p65 = scmp.ne.s32.totalorder %s48, %s64
      %p66 = scmp.eq.s32.totalorder %s26, 0
      %p67 = por %p65, %p66
      %s68 = ssub.s32 %s27, %s39
      %p69 = scmp.eq.s32.totalorder %s68, 0
      %s71 = sadd.s32 %s70, 1
      %s72 = scalar_select %p69, %s70, %s71
      %p75 = pneg %p69
      %p76 = scmp.eq.s32.totalorder %s20, 1
      %p77 = por %p75, %p76
      %p78 = scmp.ne.s32.totalorder %s70, %s73
      %p79 = scmp.eq.s32.totalorder %s20, 0
      %p80 = por %p78, %p79
      %p81 = scmp.ne.s32.totalorder %s70, %s73
      %p82 = scmp.eq.s32.totalorder %s25, 1
      %p83 = por %p81, %p82
      %p84 = scmp.ne.s32.totalorder %s73, %s74
      %p85 = scmp.eq.s32.totalorder %s25, 0
      %p86 = por %p84, %p85
      %p87 = scmp.ne.s32.totalorder %s73, %s74
      %p88 = scmp.eq.s32.totalorder %s26, 1
      %p89 = por %p87, %p88
      %p91 = scmp.ne.s32.totalorder %s74, %s90
      %p92 = scmp.eq.s32.totalorder %s26, 0
      %p93 = por %p91, %p92
      %s94 = ssub.s32 %s27, %s39
      %p95 = scmp.eq.s32.totalorder %s94, 0
      %s97 = sadd.s32 %s96, 1
      %s98 = scalar_select %p95, %s96, %s97
      %p101 = pneg %p95
      %p102 = scmp.eq.s32.totalorder %s20, 1
      %p103 = por %p101, %p102
      %p104 = scmp.ne.s32.totalorder %s96, %s99
      %p105 = scmp.eq.s32.totalorder %s20, 0
      %p106 = por %p104, %p105
      %p107 = scmp.ne.s32.totalorder %s96, %s99
      %p108 = scmp.eq.s32.totalorder %s25, 1
      %p109 = por %p107, %p108
      %p110 = scmp.ne.s32.totalorder %s99, %s100
      %p111 = scmp.eq.s32.totalorder %s25, 0
      %p112 = por %p110, %p111
      %p113 = scmp.ne.s32.totalorder %s99, %s100
      %p114 = scmp.eq.s32.totalorder %s26, 1
      %p115 = por %p113, %p114
      %p117 = scmp.ne.s32.totalorder %s100, %s116
      %p118 = scmp.eq.s32.totalorder %s26, 0
      %p119 = por %p117, %p118
      %s120 = ssub.s32 %s27, %s39
      %p121 = scmp.eq.s32.totalorder %s120, 0
      %s123 = sadd.s32 %s122, 1
      %s124 = scalar_select %p121, %s122, %s123
      %p127 = pneg %p121
      %p128 = scmp.eq.s32.totalorder %s20, 1
      %p129 = por %p127, %p128
      %p130 = scmp.ne.s32.totalorder %s122, %s125
      %p131 = scmp.eq.s32.totalorder %s20, 0
      %p132 = por %p130, %p131
      %p133 = scmp.ne.s32.totalorder %s122, %s125
      %p134 = scmp.eq.s32.totalorder %s25, 1
      %p135 = por %p133, %p134
      %p136 = scmp.ne.s32.totalorder %s125, %s126
      %p137 = scmp.eq.s32.totalorder %s25, 0
      %p138 = por %p136, %p137
      %p139 = scmp.ne.s32.totalorder %s125, %s126
      %p140 = scmp.eq.s32.totalorder %s26, 1
      %p141 = por %p139, %p140
      %p143 = scmp.ne.s32.totalorder %s126, %s142
      %p144 = scmp.eq.s32.totalorder %s26, 0
      %p145 = por %p143, %p144
      %s147 = sadd.s32 %s146, 1
      %p150 = scmp.eq.s32.totalorder %s20, 1
      %p151 = scmp.ne.s32.totalorder %s146, %s148
      %p152 = scmp.eq.s32.totalorder %s20, 0
      %p153 = por %p151, %p152
      %p154 = scmp.ne.s32.totalorder %s146, %s148
      %p155 = scmp.eq.s32.totalorder %s25, 1
      %p156 = por %p154, %p155
      %p157 = scmp.ne.s32.totalorder %s148, %s149
      %p158 = scmp.eq.s32.totalorder %s25, 0
      %p159 = por %p157, %p158
      %p160 = scmp.ne.s32.totalorder %s148, %s149
      %p161 = scmp.eq.s32.totalorder %s26, 1
      %p162 = por %p160, %p161
      %p164 = scmp.ne.s32.totalorder %s149, %s163
      %p165 = scmp.eq.s32.totalorder %s26, 0
      %p166 = por %p164, %p165
      %s168 = sadd.s32 %s167, 1
      %p171 = scmp.eq.s32.totalorder %s20, 1
      %p172 = scmp.ne.s32.totalorder %s167, %s169
      %p173 = scmp.eq.s32.totalorder %s20, 0
      %p174 = por %p172, %p173
      %p175 = scmp.ne.s32.totalorder %s167, %s169
      %p176 = scmp.eq.s32.totalorder %s25, 1
      %p177 = por %p175, %p176
      %p178 = scmp.ne.s32.totalorder %s169, %s170
      %p179 = scmp.eq.s32.totalorder %s25, 0
      %p180 = por %p178, %p179
      %p181 = scmp.ne.s32.totalorder %s169, %s170
      %p182 = scmp.eq.s32.totalorder %s26, 1
      %p183 = por %p181, %p182
      %p185 = scmp.ne.s32.totalorder %s170, %s184
      %p186 = scmp.eq.s32.totalorder %s26, 0
      %p187 = por %p185, %p186
      %s188 = ssub.s32 %s27, %s39
      %s189 = ssub.s32 %s28, %s35
      %s190 = sor.u32 %s188, %s189
      %p191 = scmp.eq.s32.totalorder %s190, 0
      %s193 = sadd.s32 %s192, 1
      %s194 = scalar_select %p191, %s192, %s193
      %p197 = pneg %p191
      %p198 = scmp.eq.s32.totalorder %s20, 1
      %p199 = por %p197, %p198
      %p200 = scmp.ne.s32.totalorder %s192, %s195
      %p201 = scmp.eq.s32.totalorder %s20, 0
      %p202 = por %p200, %p201
      %p203 = scmp.ne.s32.totalorder %s192, %s195
      %p204 = scmp.eq.s32.totalorder %s25, 1
      %p205 = por %p203, %p204
      %p206 = scmp.ne.s32.totalorder %s195, %s196
      %p207 = scmp.eq.s32.totalorder %s25, 0
      %p208 = por %p206, %p207
      %p209 = scmp.ne.s32.totalorder %s195, %s196
      %p210 = scmp.eq.s32.totalorder %s26, 1
      %p211 = por %p209, %p210
      %p213 = scmp.ne.s32.totalorder %s196, %s212
      %p214 = scmp.eq.s32.totalorder %s26, 0
      %p215 = por %p213, %p214
      %p216 = scmp.le.s32.totalorder 1, %s20
      %p217 = scmp.lt.s32.totalorder %s20, 3
      %p218 = pnand %p216, %p217
      %p219 = pneg %p218
      // Predicated region
      $region9: #{tpu_custom_call.1} parent=5 // pred_check
        _
      $region10: #{tpu_custom_call.1} parent=5 // pred_check_branch
        %221 = sbr.rel (%p218) target = $region12
      $region11: #{tpu_custom_call.1} parent=5 // pred_region
        %s222 = ssub.s32 %s20, 1
        // Predicated region
        $region13: #{tpu_custom_call.1} parent=11 // pred_check
          %p223 = pneg %p159
        $region14: #{tpu_custom_call.1} parent=11 // pred_check_branch
          %225 = sbr.rel (%p223) target = $region16
        $region15: #{tpu_custom_call.1} parent=11 // pred_region
          _
        $region16: #{tpu_custom_call.1} parent=11 // pred_fallthru
          _
        // Predicated region
        $region17: #{tpu_custom_call.1} parent=11 // pred_check
          %p226 = pneg %p180
        $region18: #{tpu_custom_call.1} parent=11 // pred_check_branch
          %228 = sbr.rel (%p226) target = $region20
        $region19: #{tpu_custom_call.1} parent=11 // pred_region
          _
        $region20: #{tpu_custom_call.1} parent=11 // pred_fallthru
          _
      $region12: #{tpu_custom_call.1} parent=5 // pred_fallthru
        _
      %p229 = scmp.lt.s32.totalorder %s20, 2
      // Predicated region
      $region21: #{tpu_custom_call.1} parent=5 // pred_check
        %p230 = pneg %p229
      $region22: #{tpu_custom_call.1} parent=5 // pred_check_branch
        %232 = sbr.rel (%p230) target = $region24
      $region23: #{tpu_custom_call.1} parent=5 // pred_region
        // Predicated region
        $region25: #{tpu_custom_call.1} parent=23 // pred_check
          %p233 = pneg %p54
        $region26: #{tpu_custom_call.1} parent=23 // pred_check_branch
          %235 = sbr.rel (%p233) target = $region28
        $region27: #{tpu_custom_call.1} parent=23 // pred_region
          %s236 = sand.u32 %s44, 1
          %s237 = scalar_lea.sflag [#allocation4], %s236
          %s238 = sand.u32 %s44, 1
          %s239 = smul.addr %s238, 128
          %s240 = scalar_lea.vmem [#allocation3], %s239
          %s241 = smul.u32 32, %s28
          %s243 = ssub.s32 2048, 2048
          %244 = vsyncadd %s237, %s243
          %s245 = smul.addr %s27, 32
          %s246 = sadd.s32 %s241, %s245
          %s247 = smul.addr %s246, 64
          %s248 = scalar_lea.hbm %s0, %s247
          %s249 = sshll.u32 %s240, 4
          %s250 = int_to_ptr.vmem [resolvable:$true] %s249
          %255 = dma.hbm_to_vmem [thread:$0]  %s248, 2048, %s250, %s237, 64, 64, 4
        $region28: #{tpu_custom_call.1} parent=23 // pred_fallthru
          _
        // Predicated region
        $region29: #{tpu_custom_call.1} parent=23 // pred_check
          %p256 = pneg %p80
        $region30: #{tpu_custom_call.1} parent=23 // pred_check_branch
          %258 = sbr.rel (%p256) target = $region32
        $region31: #{tpu_custom_call.1} parent=23 // pred_region
          %p259 = scmp.lt.s32.totalorder %s27, 1
          %s260 = scalar_select %p259, %s27, 1
          %s261 = smul.addr %s260, 16
          %s262 = smul.addr %s261, 4
          %s263 = scalar_lea.vmem %s1, %s262
        $region32: #{tpu_custom_call.1} parent=23 // pred_fallthru
          _
        // Predicated region
        $region33: #{tpu_custom_call.1} parent=23 // pred_check
          %p264 = pneg %p106
        $region34: #{tpu_custom_call.1} parent=23 // pred_check_branch
          %266 = sbr.rel (%p264) target = $region36
        $region35: #{tpu_custom_call.1} parent=23 // pred_region
          %p267 = scmp.lt.s32.totalorder %s27, 1
          %s268 = scalar_select %p267, %s27, 1
          %s269 = scalar_lea.vmem %s2, %s268
        $region36: #{tpu_custom_call.1} parent=23 // pred_fallthru
          _
        // Predicated region
        $region37: #{tpu_custom_call.1} parent=23 // pred_check
          %p270 = pneg %p132
        $region38: #{tpu_custom_call.1} parent=23 // pred_check_branch
          %272 = sbr.rel (%p270) target = $region40
        $region39: #{tpu_custom_call.1} parent=23 // pred_region
          %p273 = scmp.lt.s32.totalorder %s27, 1
          %s274 = scalar_select %p273, %s27, 1
          %s275 = smul.addr %s274, 8
          %s276 = smul.addr %s275, 4
          %s277 = scalar_lea.vmem %s3, %s276
        $region40: #{tpu_custom_call.1} parent=23 // pred_fallthru
          _
      $region24: #{tpu_custom_call.1} parent=5 // pred_fallthru
        _
      %p278 = scmp.le.s32.totalorder 1, %s20
      %p279 = scmp.lt.s32.totalorder %s20, 3
      %p280 = pnand %p278, %p279
      %p281 = pneg %p280
      // Predicated region
      $region41: #{tpu_custom_call.1} parent=5 // pred_check
        _
      $region42: #{tpu_custom_call.1} parent=5 // pred_check_branch
        %283 = sbr.rel (%p280) target = $region44
      $region43: #{tpu_custom_call.1} parent=5 // pred_region
        %s284 = ssub.s32 %s20, 1
        %s285 = sand.u32 %s47, 1
        %s286 = scalar_lea.sflag [#allocation4], %s285
        %s287 = sand.u32 %s47, 1
        %s288 = smul.addr %s287, 128
        %s289 = scalar_lea.vmem [#allocation3], %s288
        // Predicated region
        $region45: #{tpu_custom_call.1} parent=43 // pred_check
          %p290 = pneg %p60
        $region46: #{tpu_custom_call.1} parent=43 // pred_check_branch
          %292 = sbr.rel (%p290) target = $region48
        $region47: #{tpu_custom_call.1} parent=43 // pred_region
          %293 = dma.done %s286, 2048
        $region48: #{tpu_custom_call.1} parent=43 // pred_fallthru
          _
        %s294 = sand.u32 %s47, 1
        %s295 = scalar_lea.sflag [#allocation4], %s294
        %s296 = sand.u32 %s47, 1
        %s297 = smul.addr %s296, 128
        %s298 = scalar_lea.vmem [#allocation3], %s297
        %p299 = pneg %p60
        %p300 = pneg %p57
        %p301 = scmp.lt.s32.totalorder %s29, 1
        %s302 = scalar_select %p301, %s29, 1
        %s303 = smul.addr %s302, 16
        %s304 = smul.addr %s303, 4
        %s305 = scalar_lea.vmem %s1, %s304
        %p306 = pneg %p86
        %p307 = pneg %p83
        %p308 = scmp.lt.s32.totalorder %s29, 1
        %s309 = scalar_select %p308, %s29, 1
        %s310 = scalar_lea.vmem %s2, %s309
        %p311 = pneg %p112
        %p312 = pneg %p109
        %p313 = scmp.lt.s32.totalorder %s29, 1
        %s314 = scalar_select %p313, %s29, 1
        %s315 = smul.addr %s314, 8
        %s316 = smul.addr %s315, 4
        %s317 = scalar_lea.vmem %s3, %s316
        %p318 = pneg %p138
        %p319 = pneg %p135
        %p320 = pneg %p159
        %p321 = pneg %p156
        %p322 = pneg %p180
        %p323 = pneg %p177
        %p324 = pneg %p208
        %p325 = pneg %p205
        %s326 = sand.u32 %s195, 1
        %s327 = scalar_lea.sflag [#allocation5], %s326
        %s328 = sand.u32 %s195, 1
        %s329 = smul.addr %s328, 256
        %s330 = scalar_lea.vmem [#allocation6], %s329
        %s331 = smul.u32 32, %s30
        %p332 = scmp.lt.s32.totalorder %s29, 1
        %s333 = scalar_select %p332, %s29, 1
        %s334 = smul.addr %s333, 16
        %s335 = smul.addr %s334, 4
        %s336 = scalar_lea.vmem %s1, %s335
        %p337 = scmp.lt.s32.totalorder %s29, 1
        %s338 = scalar_select %p337, %s29, 1
        %s339 = scalar_lea.vmem %s2, %s338
        %p340 = scmp.lt.s32.totalorder %s29, 1
        %s341 = scalar_select %p340, %s29, 1
        %s342 = smul.addr %s341, 8
        %s343 = smul.addr %s342, 4
        %s344 = scalar_lea.vmem %s3, %s343
        %s345 = smul.u32 32, %s30
        %v347 = vld [vmem:[%s289] sm:$0xf]
        %v348 = vld [vmem:[%s289 + $0x4] sm:$0xf]
        %v349 = vld [vmem:[%s289 + $0x8] sm:$0xf]
        %v350 = vld [vmem:[%s289 + $0xc] sm:$0xf]
        %v351 = vld [vmem:[%s289 + $0x10] sm:$0xf]
        %v352 = vld [vmem:[%s289 + $0x14] sm:$0xf]
        %v353 = vld [vmem:[%s289 + $0x18] sm:$0xf]
        %v354 = vld [vmem:[%s289 + $0x1c] sm:$0xf]
        %v355 = vld [vmem:[%s289 + $0x20] sm:$0xf]
        %v356 = vld [vmem:[%s289 + $0x24] sm:$0xf]
        %v357 = vld [vmem:[%s289 + $0x28] sm:$0xf]
        %v358 = vld [vmem:[%s289 + $0x2c] sm:$0xf]
        %v359 = vld [vmem:[%s289 + $0x30] sm:$0xf]
        %v360 = vld [vmem:[%s289 + $0x34] sm:$0xf]
        %v361 = vld [vmem:[%s289 + $0x38] sm:$0xf]
        %v362 = vld [vmem:[%s289 + $0x3c] sm:$0xf]
        %v363 = vld [vmem:[%s289 + $0x40] sm:$0xf]
        %v364 = vld [vmem:[%s289 + $0x44] sm:$0xf]
        %v365 = vld [vmem:[%s289 + $0x48] sm:$0xf]
        %v366 = vld [vmem:[%s289 + $0x4c] sm:$0xf]
        %v367 = vld [vmem:[%s289 + $0x50] sm:$0xf]
        %v368 = vld [vmem:[%s289 + $0x54] sm:$0xf]
        %v369 = vld [vmem:[%s289 + $0x58] sm:$0xf]
        %v370 = vld [vmem:[%s289 + $0x5c] sm:$0xf]
        %v371 = vld [vmem:[%s289 + $0x60] sm:$0xf]
        %v372 = vld [vmem:[%s289 + $0x64] sm:$0xf]
        %v373 = vld [vmem:[%s289 + $0x68] sm:$0xf]
        %v374 = vld [vmem:[%s289 + $0x6c] sm:$0xf]
        %v375 = vld [vmem:[%s289 + $0x70] sm:$0xf]
        %v376 = vld [vmem:[%s289 + $0x74] sm:$0xf]
        %v377 = vld [vmem:[%s289 + $0x78] sm:$0xf]
        %v378 = vld [vmem:[%s289 + $0x7c] sm:$0xf]
        %v379 = vunpack.c.l.bf16 %v347
        %v380 = vunpack.c.l.bf16 %v348
        %v381 = vunpack.c.l.bf16 %v349
        %v382 = vunpack.c.l.bf16 %v350
        %v383 = vunpack.c.l.bf16 %v351
        %v384 = vunpack.c.l.bf16 %v352
        %v385 = vunpack.c.l.bf16 %v353
        %v386 = vunpack.c.l.bf16 %v354
        %v387 = vunpack.c.l.bf16 %v355
        %v388 = vunpack.c.l.bf16 %v356
        %v389 = vunpack.c.l.bf16 %v357
        %v390 = vunpack.c.l.bf16 %v358
        %v391 = vunpack.c.l.bf16 %v359
        %v392 = vunpack.c.l.bf16 %v360
        %v393 = vunpack.c.l.bf16 %v361
        %v394 = vunpack.c.l.bf16 %v362
        %v395 = vunpack.c.l.bf16 %v363
        %v396 = vunpack.c.l.bf16 %v364
        %v397 = vunpack.c.l.bf16 %v365
        %v398 = vunpack.c.l.bf16 %v366
        %v399 = vunpack.c.l.bf16 %v367
        %v400 = vunpack.c.l.bf16 %v368
        %v401 = vunpack.c.l.bf16 %v369
        %v402 = vunpack.c.l.bf16 %v370
        %v403 = vunpack.c.l.bf16 %v371
        %v404 = vunpack.c.l.bf16 %v372
        %v405 = vunpack.c.l.bf16 %v373
        %v406 = vunpack.c.l.bf16 %v374
        %v407 = vunpack.c.l.bf16 %v375
        %v408 = vunpack.c.l.bf16 %v376
        %v409 = vunpack.c.l.bf16 %v377
        %v410 = vunpack.c.l.bf16 %v378
        %v411 = vld [vmem:[%s336] sm:$0xf]
        %v412 = vld [vmem:[%s336 + $0x4] sm:$0xf]
        %v413 = vld [vmem:[%s336 + $0x8] sm:$0xf]
        %v414 = vld [vmem:[%s336 + $0xc] sm:$0xf]
        %v415 = vld [vmem:[%s336 + $0x10] sm:$0xf]
        %v416 = vld [vmem:[%s336 + $0x14] sm:$0xf]
        %v417 = vld [vmem:[%s336 + $0x18] sm:$0xf]
        %v418 = vld [vmem:[%s336 + $0x1c] sm:$0xf]
        %v419 = vld [vmem:[%s336 + $0x20] sm:$0xf]
        %v420 = vld [vmem:[%s336 + $0x24] sm:$0xf]
        %v421 = vld [vmem:[%s336 + $0x28] sm:$0xf]
        %v422 = vld [vmem:[%s336 + $0x2c] sm:$0xf]
        %v423 = vld [vmem:[%s336 + $0x30] sm:$0xf]
        %v424 = vld [vmem:[%s336 + $0x34] sm:$0xf]
        %v425 = vld [vmem:[%s336 + $0x38] sm:$0xf]
        %v426 = vld [vmem:[%s336 + $0x3c] sm:$0xf]
        %v427 = vld [vmem:[%s339] sm:$0x1]
        %v429 = vlaneseq
        %v430 = vshrl.u32 %v429, 7
        %v431 = vsub.s32 0, %v430
        %v432 = vrot.slane %v427, %v431
        %v466 = vunpack.c.l.b16 %v347
        %v467 = vunpack.c.l.b16 %v348
        %v468 = vunpack.c.l.b16 %v349
        %v469 = vunpack.c.l.b16 %v350
        %v470 = vunpack.c.l.b16 %v351
        %v471 = vunpack.c.l.b16 %v352
        %v472 = vunpack.c.l.b16 %v353
        %v473 = vunpack.c.l.b16 %v354
        %v474 = vunpack.c.l.b16 %v355
        %v475 = vunpack.c.l.b16 %v356
        %v476 = vunpack.c.l.b16 %v357
        %v477 = vunpack.c.l.b16 %v358
        %v478 = vunpack.c.l.b16 %v359
        %v479 = vunpack.c.l.b16 %v360
        %v480 = vunpack.c.l.b16 %v361
        %v481 = vunpack.c.l.b16 %v362
        %v482 = vunpack.c.l.b16 %v363
        %v483 = vunpack.c.l.b16 %v364
        %v484 = vunpack.c.l.b16 %v365
        %v485 = vunpack.c.l.b16 %v366
        %v486 = vunpack.c.l.b16 %v367
        %v487 = vunpack.c.l.b16 %v368
        %v488 = vunpack.c.l.b16 %v369
        %v489 = vunpack.c.l.b16 %v370
        %v490 = vunpack.c.l.b16 %v371
        %v491 = vunpack.c.l.b16 %v372
        %v492 = vunpack.c.l.b16 %v373
        %v493 = vunpack.c.l.b16 %v374
        %v494 = vunpack.c.l.b16 %v375
        %v495 = vunpack.c.l.b16 %v376
        %v496 = vunpack.c.l.b16 %v377
        %v497 = vunpack.c.l.b16 %v378
        %v498 = vpack.c.b16 %v467, %v466
        %v499 = vpack.c.b16 %v469, %v468
        %v500 = vpack.c.b16 %v471, %v470
        %v501 = vpack.c.b16 %v473, %v472
        %v502 = vpack.c.b16 %v475, %v474
        %v503 = vpack.c.b16 %v477, %v476
        %v504 = vpack.c.b16 %v479, %v478
        %v505 = vpack.c.b16 %v481, %v480
        %v506 = vpack.c.b16 %v483, %v482
        %v507 = vpack.c.b16 %v485, %v484
        %v508 = vpack.c.b16 %v487, %v486
        %v509 = vpack.c.b16 %v489, %v488
        %v510 = vpack.c.b16 %v491, %v490
        %v511 = vpack.c.b16 %v493, %v492
        %v512 = vpack.c.b16 %v495, %v494
        %v513 = vpack.c.b16 %v497, %v496
        %v546 = vunpack.c.l.b16 %v411
        %v547 = vunpack.c.l.b16 %v412
        %v548 = vunpack.c.l.b16 %v413
        %v549 = vunpack.c.l.b16 %v414
        %v550 = vunpack.c.l.b16 %v415
        %v551 = vunpack.c.l.b16 %v416
        %v552 = vunpack.c.l.b16 %v417
        %v553 = vunpack.c.l.b16 %v418
        %v554 = vunpack.c.l.b16 %v419
        %v555 = vunpack.c.l.b16 %v420
        %v556 = vunpack.c.l.b16 %v421
        %v557 = vunpack.c.l.b16 %v422
        %v558 = vunpack.c.l.b16 %v423
        %v559 = vunpack.c.l.b16 %v424
        %v560 = vunpack.c.l.b16 %v425
        %v561 = vunpack.c.l.b16 %v426
        %v562 = vpack.c.b16 %v547, %v546
        %v563 = vpack.c.b16 %v549, %v548
        %v564 = vpack.c.b16 %v551, %v550
        %v565 = vpack.c.b16 %v553, %v552
        %v566 = vpack.c.b16 %v555, %v554
        %v567 = vpack.c.b16 %v557, %v556
        %v568 = vpack.c.b16 %v559, %v558
        %v569 = vpack.c.b16 %v561, %v560
        %578 = vmatprep.subr.bf16.mxu0 0
        %579 = vmatpush1.bf16.msra.mxu0 %v562
        %580 = vmatprep.subr.bf16.mxu0 0
        %581 = vmatpush1.bf16.msra.mxu0 %v563
        %582 = vmatprep.subr.bf16.mxu0 0
        %583 = vmatpush1.bf16.msra.mxu0 %v564
        %584 = vmatprep.subr.bf16.mxu0 0
        %585 = vmatpush1.bf16.msra.mxu0 %v565
        %586 = vmatprep.subr.bf16.mxu0 0
        %587 = vmatpush1.bf16.msra.mxu0 %v566
        %588 = vmatprep.subr.bf16.mxu0 0
        %589 = vmatpush1.bf16.msra.mxu0 %v567
        %590 = vmatprep.subr.bf16.mxu0 0
        %591 = vmatpush1.bf16.msra.mxu0 %v568
        %592 = vmatprep.subr.bf16.mxu0 0
        %593 = vmatpush1.bf16.msra.mxu0 %v569
        %594 = vmatprep.subr.bf16.mxu0 0
        %595 = vmatpush1.bf16.msra.mxu0 0
        %596 = vmatprep.subr.bf16.mxu0 0
        %597 = vmatpush1.bf16.msra.mxu0 0
        %598 = vmatprep.subr.bf16.mxu0 0
        %599 = vmatpush1.bf16.msra.mxu0 0
        %600 = vmatprep.subr.bf16.mxu0 0
        %601 = vmatpush1.bf16.msra.mxu0 0
        %602 = vmatprep.subr.bf16.mxu0 0
        %603 = vmatpush1.bf16.msra.mxu0 0
        %604 = vmatprep.subr.bf16.mxu0 0
        %605 = vmatpush1.bf16.msra.mxu0 0
        %606 = vmatprep.subr.bf16.mxu0 0
        %607 = vmatpush1.bf16.msra.mxu0 0
        %608 = vmatprep.subr.bf16.mxu0 0
        %609 = vmatpush1.bf16.msra.mxu0 0
        %610 = vmatprep.mubr.bf16.mxu0 0
        %611 = vmatmul.mubr.bf16.gmra.mrb[0].mxu0 %v498
        %v612 = vpop.f32.mrb[0].mxu0
        %v613 = vadd.f32 %v432, %v612
        %v614 = vpop.f32.mrb[0].mxu0
        %v615 = vpop.f32.mrb[0].mxu0
        %v616 = vadd.f32 %v432, %v615
        %v617 = vpop.f32.mrb[0].mxu0
        %618 = vmatprep.mubr.bf16.mxu0 0
        %619 = vmatmul.mubr.bf16.gmra.mrb[0].mxu0 %v499
        %v620 = vpop.f32.mrb[0].mxu0
        %v621 = vadd.f32 %v432, %v620
        %v622 = vpop.f32.mrb[0].mxu0
        %v623 = vpop.f32.mrb[0].mxu0
        %v624 = vadd.f32 %v432, %v623
        %v625 = vpop.f32.mrb[0].mxu0
        %626 = vmatprep.mubr.bf16.mxu0 0
        %627 = vmatmul.mubr.bf16.gmra.mrb[0].mxu0 %v500
        %v628 = vpop.f32.mrb[0].mxu0
        %v629 = vadd.f32 %v432, %v628
        %v630 = vpop.f32.mrb[0].mxu0
        %v631 = vpop.f32.mrb[0].mxu0
        %v632 = vadd.f32 %v432, %v631
        %v633 = vpop.f32.mrb[0].mxu0
        %634 = vmatprep.mubr.bf16.mxu0 0
        %635 = vmatmul.mubr.bf16.gmra.mrb[0].mxu0 %v501
        %v636 = vpop.f32.mrb[0].mxu0
        %v637 = vadd.f32 %v432, %v636
        %v638 = vpop.f32.mrb[0].mxu0
        %v639 = vpop.f32.mrb[0].mxu0
        %v640 = vadd.f32 %v432, %v639
        %v641 = vpop.f32.mrb[0].mxu0
        %642 = vmatprep.mubr.bf16.mxu0 0
        %643 = vmatmul.mubr.bf16.gmra.mrb[0].mxu0 %v502
        %v644 = vpop.f32.mrb[0].mxu0
        %v645 = vadd.f32 %v432, %v644
        %v646 = vpop.f32.mrb[0].mxu0
        %v647 = vpop.f32.mrb[0].mxu0
        %v648 = vadd.f32 %v432, %v647
        %v649 = vpop.f32.mrb[0].mxu0
        %650 = vmatprep.mubr.bf16.mxu0 0
        %651 = vmatmul.mubr.bf16.gmra.mrb[0].mxu0 %v503
        %v652 = vpop.f32.mrb[0].mxu0
        %v653 = vadd.f32 %v432, %v652
        %v654 = vpop.f32.mrb[0].mxu0
        %v655 = vpop.f32.mrb[0].mxu0
        %v656 = vadd.f32 %v432, %v655
        %v657 = vpop.f32.mrb[0].mxu0
        %658 = vmatprep.mubr.bf16.mxu0 0
        %659 = vmatmul.mubr.bf16.gmra.mrb[0].mxu0 %v504
        %v660 = vpop.f32.mrb[0].mxu0
        %v661 = vadd.f32 %v432, %v660
        %v662 = vpop.f32.mrb[0].mxu0
        %v663 = vpop.f32.mrb[0].mxu0
        %v664 = vadd.f32 %v432, %v663
        %v665 = vpop.f32.mrb[0].mxu0
        %666 = vmatprep.mubr.bf16.mxu0 0
        %667 = vmatmul.mubr.bf16.gmra.mrb[0].mxu0 %v505
        %v668 = vpop.f32.mrb[0].mxu0
        %v669 = vadd.f32 %v432, %v668
        %v670 = vpop.f32.mrb[0].mxu0
        %v671 = vpop.f32.mrb[0].mxu0
        %v672 = vadd.f32 %v432, %v671
        %v673 = vpop.f32.mrb[0].mxu0
        %674 = vmatprep.mubr.bf16.mxu0 0
        %675 = vmatmul.mubr.bf16.gmra.mrb[0].mxu0 %v506
        %v676 = vpop.f32.mrb[0].mxu0
        %v677 = vadd.f32 %v432, %v676
        %v678 = vpop.f32.mrb[0].mxu0
        %v679 = vpop.f32.mrb[0].mxu0
        %v680 = vadd.f32 %v432, %v679
        %v681 = vpop.f32.mrb[0].mxu0
        %682 = vmatprep.mubr.bf16.mxu0 0
        %683 = vmatmul.mubr.bf16.gmra.mrb[0].mxu0 %v507
        %v684 = vpop.f32.mrb[0].mxu0
        %v685 = vadd.f32 %v432, %v684
        %v686 = vpop.f32.mrb[0].mxu0
        %v687 = vpop.f32.mrb[0].mxu0
        %v688 = vadd.f32 %v432, %v687
        %v689 = vpop.f32.mrb[0].mxu0
        %690 = vmatprep.mubr.bf16.mxu0 0
        %691 = vmatmul.mubr.bf16.gmra.mrb[0].mxu0 %v508
        %v692 = vpop.f32.mrb[0].mxu0
        %v693 = vadd.f32 %v432, %v692
        %v694 = vpop.f32.mrb[0].mxu0
        %v695 = vpop.f32.mrb[0].mxu0
        %v696 = vadd.f32 %v432, %v695
        %v697 = vpop.f32.mrb[0].mxu0
        %698 = vmatprep.mubr.bf16.mxu0 0
        %699 = vmatmul.mubr.bf16.gmra.mrb[0].mxu0 %v509
        %v700 = vpop.f32.mrb[0].mxu0
        %v701 = vadd.f32 %v432, %v700
        %v702 = vpop.f32.mrb[0].mxu0
        %v703 = vpop.f32.mrb[0].mxu0
        %v704 = vadd.f32 %v432, %v703
        %v705 = vpop.f32.mrb[0].mxu0
        %706 = vmatprep.mubr.bf16.mxu0 0
        %707 = vmatmul.mubr.bf16.gmra.mrb[0].mxu0 %v510
        %v708 = vpop.f32.mrb[0].mxu0
        %v709 = vadd.f32 %v432, %v708
        %v710 = vpop.f32.mrb[0].mxu0
        %v711 = vpop.f32.mrb[0].mxu0
        %v712 = vadd.f32 %v432, %v711
        %v713 = vpop.f32.mrb[0].mxu0
        %714 = vmatprep.mubr.bf16.mxu0 0
        %715 = vmatmul.mubr.bf16.gmra.mrb[0].mxu0 %v511
        %v716 = vpop.f32.mrb[0].mxu0
        %v717 = vadd.f32 %v432, %v716
        %v718 = vpop.f32.mrb[0].mxu0
        %v719 = vpop.f32.mrb[0].mxu0
        %v720 = vadd.f32 %v432, %v719
        %v721 = vpop.f32.mrb[0].mxu0
        %722 = vmatprep.mubr.bf16.mxu0 0
        %723 = vmatmul.mubr.bf16.gmra.mrb[0].mxu0 %v512
        %v724 = vpop.f32.mrb[0].mxu0
        %v725 = vadd.f32 %v432, %v724
        %v726 = vpop.f32.mrb[0].mxu0
        %v727 = vpop.f32.mrb[0].mxu0
        %v728 = vadd.f32 %v432, %v727
        %v729 = vpop.f32.mrb[0].mxu0
        %730 = vmatprep.mubr.bf16.mxu0 0
        %731 = vmatmul.mubr.bf16.gmra.mrb[0].mxu0 %v513
        %v732 = vpop.f32.mrb[0].mxu0
        %v733 = vadd.f32 %v432, %v732
        %v734 = vpop.f32.mrb[0].mxu0
        %v735 = vpop.f32.mrb[0].mxu0
        %v736 = vadd.f32 %v432, %v735
        %v737 = vpop.f32.mrb[0].mxu0
        %738 = vdwg.mxu0
        %vm739 = vcmask 523264
        %v740 = vsel %vm739, %v613, -inf
        %741 = vmax.xlane.f32.xlu0 %v740
        %v742 = vpop.xlane.xlu0 %741
        %v743 = vsel %vm739, %v616, -inf
        %744 = vmax.xlane.f32.xlu0 %v743
        %v745 = vpop.xlane.xlu0 %744
        %v746 = vsel %vm739, %v621, -inf
        %747 = vmax.xlane.f32.xlu0 %v746
        %v748 = vpop.xlane.xlu0 %747
        %v749 = vsel %vm739, %v624, -inf
        %750 = vmax.xlane.f32.xlu0 %v749
        %v751 = vpop.xlane.xlu0 %750
        %v752 = vsel %vm739, %v629, -inf
        %753 = vmax.xlane.f32.xlu0 %v752
        %v754 = vpop.xlane.xlu0 %753
        %v755 = vsel %vm739, %v632, -inf
        %756 = vmax.xlane.f32.xlu0 %v755
        %v757 = vpop.xlane.xlu0 %756
        %v758 = vsel %vm739, %v637, -inf
        %759 = vmax.xlane.f32.xlu0 %v758
        %v760 = vpop.xlane.xlu0 %759
        %v761 = vsel %vm739, %v640, -inf
        %762 = vmax.xlane.f32.xlu0 %v761
        %v763 = vpop.xlane.xlu0 %762
        %v764 = vsel %vm739, %v645, -inf
        %765 = vmax.xlane.f32.xlu0 %v764
        %v766 = vpop.xlane.xlu0 %765
        %v767 = vsel %vm739, %v648, -inf
        %768 = vmax.xlane.f32.xlu0 %v767
        %v769 = vpop.xlane.xlu0 %768
        %v770 = vsel %vm739, %v653, -inf
        %771 = vmax.xlane.f32.xlu0 %v770
        %v772 = vpop.xlane.xlu0 %771
        %v773 = vsel %vm739, %v656, -inf
        %774 = vmax.xlane.f32.xlu0 %v773
        %v775 = vpop.xlane.xlu0 %774
        %v776 = vsel %vm739, %v661, -inf
        %777 = vmax.xlane.f32.xlu0 %v776
        %v778 = vpop.xlane.xlu0 %777
        %v779 = vsel %vm739, %v664, -inf
        %780 = vmax.xlane.f32.xlu0 %v779
        %v781 = vpop.xlane.xlu0 %780
        %v782 = vsel %vm739, %v669, -inf
        %783 = vmax.xlane.f32.xlu0 %v782
        %v784 = vpop.xlane.xlu0 %783
        %v785 = vsel %vm739, %v672, -inf
        %786 = vmax.xlane.f32.xlu0 %v785
        %v787 = vpop.xlane.xlu0 %786
        %v788 = vsel %vm739, %v677, -inf
        %789 = vmax.xlane.f32.xlu0 %v788
        %v790 = vpop.xlane.xlu0 %789
        %v791 = vsel %vm739, %v680, -inf
        %792 = vmax.xlane.f32.xlu0 %v791
        %v793 = vpop.xlane.xlu0 %792
        %v794 = vsel %vm739, %v685, -inf
        %795 = vmax.xlane.f32.xlu0 %v794
        %v796 = vpop.xlane.xlu0 %795
        %v797 = vsel %vm739, %v688, -inf
        %798 = vmax.xlane.f32.xlu0 %v797
        %v799 = vpop.xlane.xlu0 %798
        %v800 = vsel %vm739, %v693, -inf
        %801 = vmax.xlane.f32.xlu0 %v800
        %v802 = vpop.xlane.xlu0 %801
        %v803 = vsel %vm739, %v696, -inf
        %804 = vmax.xlane.f32.xlu0 %v803
        %v805 = vpop.xlane.xlu0 %804
        %v806 = vsel %vm739, %v701, -inf
        %807 = vmax.xlane.f32.xlu0 %v806
        %v808 = vpop.xlane.xlu0 %807
        %v809 = vsel %vm739, %v704, -inf
        %810 = vmax.xlane.f32.xlu0 %v809
        %v811 = vpop.xlane.xlu0 %810
        %v812 = vsel %vm739, %v709, -inf
        %813 = vmax.xlane.f32.xlu0 %v812
        %v814 = vpop.xlane.xlu0 %813
        %v815 = vsel %vm739, %v712, -inf
        %816 = vmax.xlane.f32.xlu0 %v815
        %v817 = vpop.xlane.xlu0 %816
        %v818 = vsel %vm739, %v717, -inf
        %819 = vmax.xlane.f32.xlu0 %v818
        %v820 = vpop.xlane.xlu0 %819
        %v821 = vsel %vm739, %v720, -inf
        %822 = vmax.xlane.f32.xlu0 %v821
        %v823 = vpop.xlane.xlu0 %822
        %v824 = vsel %vm739, %v725, -inf
        %825 = vmax.xlane.f32.xlu0 %v824
        %v826 = vpop.xlane.xlu0 %825
        %v827 = vsel %vm739, %v728, -inf
        %828 = vmax.xlane.f32.xlu0 %v827
        %v829 = vpop.xlane.xlu0 %828
        %v830 = vsel %vm739, %v733, -inf
        %831 = vmax.xlane.f32.xlu0 %v830
        %v832 = vpop.xlane.xlu0 %831
        %v833 = vsel %vm739, %v736, -inf
        %834 = vmax.xlane.f32.xlu0 %v833
        %v835 = vpop.xlane.xlu0 %834
        %v836 = vsub.f32 %v613, %v742
        %v837 = vsub.f32 %v616, %v745
        %v838 = vsub.f32 %v621, %v748
        %v839 = vsub.f32 %v624, %v751
        %v840 = vsub.f32 %v629, %v754
        %v841 = vsub.f32 %v632, %v757
        %v842 = vsub.f32 %v637, %v760
        %v843 = vsub.f32 %v640, %v763
        %v844 = vsub.f32 %v645, %v766
        %v845 = vsub.f32 %v648, %v769
        %v846 = vsub.f32 %v653, %v772
        %v847 = vsub.f32 %v656, %v775
        %v848 = vsub.f32 %v661, %v778
        %v849 = vsub.f32 %v664, %v781
        %v850 = vsub.f32 %v669, %v784
        %v851 = vsub.f32 %v672, %v787
        %v852 = vsub.f32 %v677, %v790
        %v853 = vsub.f32 %v680, %v793
        %v854 = vsub.f32 %v685, %v796
        %v855 = vsub.f32 %v688, %v799
        %v856 = vsub.f32 %v693, %v802
        %v857 = vsub.f32 %v696, %v805
        %v858 = vsub.f32 %v701, %v808
        %v859 = vsub.f32 %v704, %v811
        %v860 = vsub.f32 %v709, %v814
        %v861 = vsub.f32 %v712, %v817
        %v862 = vsub.f32 %v717, %v820
        %v863 = vsub.f32 %v720, %v823
        %v864 = vsub.f32 %v725, %v826
        %v865 = vsub.f32 %v728, %v829
        %v866 = vsub.f32 %v733, %v832
        %v867 = vsub.f32 %v736, %v835
        %v868 = vmul.f32 %v836, 1.442695
        %v869 = vpow.pop %v868
        %v870 = vmul.f32 %v837, 1.442695
        %v871 = vpow.pop %v870
        %v872 = vmul.f32 %v838, 1.442695
        %v873 = vpow.pop %v872
        %v874 = vmul.f32 %v839, 1.442695
        %v875 = vpow.pop %v874
        %v876 = vmul.f32 %v840, 1.442695
        %v877 = vpow.pop %v876
        %v878 = vmul.f32 %v841, 1.442695
        %v879 = vpow.pop %v878
        %v880 = vmul.f32 %v842, 1.442695
        %v881 = vpow.pop %v880
        %v882 = vmul.f32 %v843, 1.442695
        %v883 = vpow.pop %v882
        %v884 = vmul.f32 %v844, 1.442695
        %v885 = vpow.pop %v884
        %v886 = vmul.f32 %v845, 1.442695
        %v887 = vpow.pop %v886
        %v888 = vmul.f32 %v846, 1.442695
        %v889 = vpow.pop %v888
        %v890 = vmul.f32 %v847, 1.442695
        %v891 = vpow.pop %v890
        %v892 = vmul.f32 %v848, 1.442695
        %v893 = vpow.pop %v892
        %v894 = vmul.f32 %v849, 1.442695
        %v895 = vpow.pop %v894
        %v896 = vmul.f32 %v850, 1.442695
        %v897 = vpow.pop %v896
        %v898 = vmul.f32 %v851, 1.442695
        %v899 = vpow.pop %v898
        %v900 = vmul.f32 %v852, 1.442695
        %v901 = vpow.pop %v900
        %v902 = vmul.f32 %v853, 1.442695
        %v903 = vpow.pop %v902
        %v904 = vmul.f32 %v854, 1.442695
        %v905 = vpow.pop %v904
        %v906 = vmul.f32 %v855, 1.442695
        %v907 = vpow.pop %v906
        %v908 = vmul.f32 %v856, 1.442695
        %v909 = vpow.pop %v908
        %v910 = vmul.f32 %v857, 1.442695
        %v911 = vpow.pop %v910
        %v912 = vmul.f32 %v858, 1.442695
        %v913 = vpow.pop %v912
        %v914 = vmul.f32 %v859, 1.442695
        %v915 = vpow.pop %v914
        %v916 = vmul.f32 %v860, 1.442695
        %v917 = vpow.pop %v916
        %v918 = vmul.f32 %v861, 1.442695
        %v919 = vpow.pop %v918
        %v920 = vmul.f32 %v862, 1.442695
        %v921 = vpow.pop %v920
        %v922 = vmul.f32 %v863, 1.442695
        %v923 = vpow.pop %v922
        %v924 = vmul.f32 %v864, 1.442695
        %v925 = vpow.pop %v924
        %v926 = vmul.f32 %v865, 1.442695
        %v927 = vpow.pop %v926
        %v928 = vmul.f32 %v866, 1.442695
        %v929 = vpow.pop %v928
        %v930 = vmul.f32 %v867, 1.442695
        %v931 = vpow.pop %v930
        %v932 = vsel %vm739, %v869, 0.0
        %933 = vadd.xlane.f32.xlu0 %v932
        %v934 = vpop.xlane.xlu0 %933
        %v935 = vsel %vm739, %v871, 0.0
        %936 = vadd.xlane.f32.xlu0 %v935
        %v937 = vpop.xlane.xlu0 %936
        %v938 = vsel %vm739, %v873, 0.0
        %939 = vadd.xlane.f32.xlu0 %v938
        %v940 = vpop.xlane.xlu0 %939
        %v941 = vsel %vm739, %v875, 0.0
        %942 = vadd.xlane.f32.xlu0 %v941
        %v943 = vpop.xlane.xlu0 %942
        %v944 = vsel %vm739, %v877, 0.0
        %945 = vadd.xlane.f32.xlu0 %v944
        %v946 = vpop.xlane.xlu0 %945
        %v947 = vsel %vm739, %v879, 0.0
        %948 = vadd.xlane.f32.xlu0 %v947
        %v949 = vpop.xlane.xlu0 %948
        %v950 = vsel %vm739, %v881, 0.0
        %951 = vadd.xlane.f32.xlu0 %v950
        %v952 = vpop.xlane.xlu0 %951
        %v953 = vsel %vm739, %v883, 0.0
        %954 = vadd.xlane.f32.xlu0 %v953
        %v955 = vpop.xlane.xlu0 %954
        %v956 = vsel %vm739, %v885, 0.0
        %957 = vadd.xlane.f32.xlu0 %v956
        %v958 = vpop.xlane.xlu0 %957
        %v959 = vsel %vm739, %v887, 0.0
        %960 = vadd.xlane.f32.xlu0 %v959
        %v961 = vpop.xlane.xlu0 %960
        %v962 = vsel %vm739, %v889, 0.0
        %963 = vadd.xlane.f32.xlu0 %v962
        %v964 = vpop.xlane.xlu0 %963
        %v965 = vsel %vm739, %v891, 0.0
        %966 = vadd.xlane.f32.xlu0 %v965
        %v967 = vpop.xlane.xlu0 %966
        %v968 = vsel %vm739, %v893, 0.0
        %969 = vadd.xlane.f32.xlu0 %v968
        %v970 = vpop.xlane.xlu0 %969
        %v971 = vsel %vm739, %v895, 0.0
        %972 = vadd.xlane.f32.xlu0 %v971
        %v973 = vpop.xlane.xlu0 %972
        %v974 = vsel %vm739, %v897, 0.0
        %975 = vadd.xlane.f32.xlu0 %v974
        %v976 = vpop.xlane.xlu0 %975
        %v977 = vsel %vm739, %v899, 0.0
        %978 = vadd.xlane.f32.xlu0 %v977
        %v979 = vpop.xlane.xlu0 %978
        %v980 = vsel %vm739, %v901, 0.0
        %981 = vadd.xlane.f32.xlu0 %v980
        %v982 = vpop.xlane.xlu0 %981
        %v983 = vsel %vm739, %v903, 0.0
        %984 = vadd.xlane.f32.xlu0 %v983
        %v985 = vpop.xlane.xlu0 %984
        %v986 = vsel %vm739, %v905, 0.0
        %987 = vadd.xlane.f32.xlu0 %v986
        %v988 = vpop.xlane.xlu0 %987
        %v989 = vsel %vm739, %v907, 0.0
        %990 = vadd.xlane.f32.xlu0 %v989
        %v991 = vpop.xlane.xlu0 %990
        %v992 = vsel %vm739, %v909, 0.0
        %993 = vadd.xlane.f32.xlu0 %v992
        %v994 = vpop.xlane.xlu0 %993
        %v995 = vsel %vm739, %v911, 0.0
        %996 = vadd.xlane.f32.xlu0 %v995
        %v997 = vpop.xlane.xlu0 %996
        %v998 = vsel %vm739, %v913, 0.0
        %999 = vadd.xlane.f32.xlu0 %v998
        %v1000 = vpop.xlane.xlu0 %999
        %v1001 = vsel %vm739, %v915, 0.0
        %1002 = vadd.xlane.f32.xlu0 %v1001
        %v1003 = vpop.xlane.xlu0 %1002
        %v1004 = vsel %vm739, %v917, 0.0
        %1005 = vadd.xlane.f32.xlu0 %v1004
        %v1006 = vpop.xlane.xlu0 %1005
        %v1007 = vsel %vm739, %v919, 0.0
        %1008 = vadd.xlane.f32.xlu0 %v1007
        %v1009 = vpop.xlane.xlu0 %1008
        %v1010 = vsel %vm739, %v921, 0.0
        %1011 = vadd.xlane.f32.xlu0 %v1010
        %v1012 = vpop.xlane.xlu0 %1011
        %v1013 = vsel %vm739, %v923, 0.0
        %1014 = vadd.xlane.f32.xlu0 %v1013
        %v1015 = vpop.xlane.xlu0 %1014
        %v1016 = vsel %vm739, %v925, 0.0
        %1017 = vadd.xlane.f32.xlu0 %v1016
        %v1018 = vpop.xlane.xlu0 %1017
        %v1019 = vsel %vm739, %v927, 0.0
        %1020 = vadd.xlane.f32.xlu0 %v1019
        %v1021 = vpop.xlane.xlu0 %1020
        %v1022 = vsel %vm739, %v929, 0.0
        %1023 = vadd.xlane.f32.xlu0 %v1022
        %v1024 = vpop.xlane.xlu0 %1023
        %v1025 = vsel %vm739, %v931, 0.0
        %1026 = vadd.xlane.f32.xlu0 %v1025
        %v1027 = vpop.xlane.xlu0 %1026
        %v1028 = vpack.c.bf16 %v871, %v869
        %v1029 = vpack.c.bf16 %v875, %v873
        %v1030 = vpack.c.bf16 %v879, %v877
        %v1031 = vpack.c.bf16 %v883, %v881
        %v1032 = vpack.c.bf16 %v887, %v885
        %v1033 = vpack.c.bf16 %v891, %v889
        %v1034 = vpack.c.bf16 %v895, %v893
        %v1035 = vpack.c.bf16 %v899, %v897
        %v1036 = vpack.c.bf16 %v903, %v901
        %v1037 = vpack.c.bf16 %v907, %v905
        %v1038 = vpack.c.bf16 %v911, %v909
        %v1039 = vpack.c.bf16 %v915, %v913
        %v1040 = vpack.c.bf16 %v919, %v917
        %v1041 = vpack.c.bf16 %v923, %v921
        %v1042 = vpack.c.bf16 %v927, %v925
        %v1043 = vpack.c.bf16 %v931, %v929
        %v1044 = vld [vmem:[%s344] sm:$0xf]
        %v1045 = vld [vmem:[%s344 + $0x4] sm:$0xf]
        %v1046 = vld [vmem:[%s344 + $0x8] sm:$0xf]
        %v1047 = vld [vmem:[%s344 + $0xc] sm:$0xf]
        %v1048 = vld [vmem:[%s344 + $0x10] sm:$0xf]
        %v1049 = vld [vmem:[%s344 + $0x14] sm:$0xf]
        %v1050 = vld [vmem:[%s344 + $0x18] sm:$0xf]
        %v1051 = vld [vmem:[%s344 + $0x1c] sm:$0xf]
        %v1060 = vunpack.c.l.b16 %v1044
        %v1061 = vunpack.c.l.b16 %v1045
        %v1062 = vunpack.c.l.b16 %v1046
        %v1063 = vunpack.c.l.b16 %v1047
        %v1064 = vunpack.c.l.b16 %v1048
        %v1065 = vunpack.c.l.b16 %v1049
        %v1066 = vunpack.c.l.b16 %v1050
        %v1067 = vunpack.c.l.b16 %v1051
        %v1068 = vpack.c.b16 %v1061, %v1060
        %v1069 = vpack.c.b16 %v1063, %v1062
        %v1070 = vpack.c.b16 %v1065, %v1064
        %v1071 = vpack.c.b16 %v1067, %v1066
        %v1077 = vsel %vm739, %v1028, 0
        %v1080 = vsel %vm739, %v1029, 0
        %v1083 = vsel %vm739, %v1030, 0
        %v1086 = vsel %vm739, %v1031, 0
        %v1089 = vsel %vm739, %v1032, 0
        %v1092 = vsel %vm739, %v1033, 0
        %v1095 = vsel %vm739, %v1034, 0
        %v1098 = vsel %vm739, %v1035, 0
        %v1101 = vsel %vm739, %v1036, 0
        %v1104 = vsel %vm739, %v1037, 0
        %v1107 = vsel %vm739, %v1038, 0
        %v1110 = vsel %vm739, %v1039, 0
        %v1113 = vsel %vm739, %v1040, 0
        %v1116 = vsel %vm739, %v1041, 0
        %v1119 = vsel %vm739, %v1042, 0
        %v1122 = vsel %vm739, %v1043, 0
        %1124 = vmatprep.subr.bf16.mxu0 0
        %1125 = vmatpush1.bf16.msra.mxu0 %v1068
        %1126 = vmatprep.subr.bf16.mxu0 0
        %1127 = vmatpush1.bf16.msra.mxu0 %v1069
        %1128 = vmatprep.subr.bf16.mxu0 0
        %1129 = vmatpush1.bf16.msra.mxu0 %v1070
        %1130 = vmatprep.subr.bf16.mxu0 0
        %1131 = vmatpush1.bf16.msra.mxu0 %v1071
        %1132 = vmatprep.subr.bf16.mxu0 0
        %1133 = vmatpush1.bf16.msra.mxu0 0
        %1134 = vmatprep.subr.bf16.mxu0 0
        %1135 = vmatpush1.bf16.msra.mxu0 0
        %1136 = vmatprep.subr.bf16.mxu0 0
        %1137 = vmatpush1.bf16.msra.mxu0 0
        %1138 = vmatprep.subr.bf16.mxu0 0
        %1139 = vmatpush1.bf16.msra.mxu0 0
        %1140 = vmatprep.subr.bf16.mxu0 0
        %1141 = vmatpush1.bf16.msra.mxu0 0
        %1142 = vmatprep.subr.bf16.mxu0 0
        %1143 = vmatpush1.bf16.msra.mxu0 0
        %1144 = vmatprep.subr.bf16.mxu0 0
        %1145 = vmatpush1.bf16.msra.mxu0 0
        %1146 = vmatprep.subr.bf16.mxu0 0
        %1147 = vmatpush1.bf16.msra.mxu0 0
        %1148 = vmatprep.subr.bf16.mxu0 0
        %1149 = vmatpush1.bf16.msra.mxu0 0
        %1150 = vmatprep.subr.bf16.mxu0 0
        %1151 = vmatpush1.bf16.msra.mxu0 0
        %1152 = vmatprep.subr.bf16.mxu0 0
        %1153 = vmatpush1.bf16.msra.mxu0 0
        %1154 = vmatprep.subr.bf16.mxu0 0
        %1155 = vmatpush1.bf16.msra.mxu0 0
        %1156 = vmatprep.mubr.bf16.mxu0 0
        %1157 = vmatmul.mubr.bf16.gmra.mrb[0].mxu0 %v1077
        %v1158 = vpop.f32.mrb[0].mxu0
        %v1159 = vadd.f32 0.0, %v1158
        %v1160 = vpop.f32.mrb[0].mxu0
        %v1161 = vpop.f32.mrb[0].mxu0
        %v1162 = vadd.f32 0.0, %v1161
        %v1163 = vpop.f32.mrb[0].mxu0
        %1164 = vmatprep.mubr.bf16.mxu0 0
        %1165 = vmatmul.mubr.bf16.gmra.mrb[0].mxu0 %v1080
        %v1166 = vpop.f32.mrb[0].mxu0
        %v1167 = vadd.f32 0.0, %v1166
        %v1168 = vpop.f32.mrb[0].mxu0
        %v1169 = vpop.f32.mrb[0].mxu0
        %v1170 = vadd.f32 0.0, %v1169
        %v1171 = vpop.f32.mrb[0].mxu0
        %1172 = vmatprep.mubr.bf16.mxu0 0
        %1173 = vmatmul.mubr.bf16.gmra.mrb[0].mxu0 %v1083
        %v1174 = vpop.f32.mrb[0].mxu0
        %v1175 = vadd.f32 0.0, %v1174
        %v1176 = vpop.f32.mrb[0].mxu0
        %v1177 = vpop.f32.mrb[0].mxu0
        %v1178 = vadd.f32 0.0, %v1177
        %v1179 = vpop.f32.mrb[0].mxu0
        %1180 = vmatprep.mubr.bf16.mxu0 0
        %1181 = vmatmul.mubr.bf16.gmra.mrb[0].mxu0 %v1086
        %v1182 = vpop.f32.mrb[0].mxu0
        %v1183 = vadd.f32 0.0, %v1182
        %v1184 = vpop.f32.mrb[0].mxu0
        %v1185 = vpop.f32.mrb[0].mxu0
        %v1186 = vadd.f32 0.0, %v1185
        %v1187 = vpop.f32.mrb[0].mxu0
        %1188 = vmatprep.mubr.bf16.mxu0 0
        %1189 = vmatmul.mubr.bf16.gmra.mrb[0].mxu0 %v1089
        %v1190 = vpop.f32.mrb[0].mxu0
        %v1191 = vadd.f32 0.0, %v1190
        %v1192 = vpop.f32.mrb[0].mxu0
        %v1193 = vpop.f32.mrb[0].mxu0
        %v1194 = vadd.f32 0.0, %v1193
        %v1195 = vpop.f32.mrb[0].mxu0
        %1196 = vmatprep.mubr.bf16.mxu0 0
        %1197 = vmatmul.mubr.bf16.gmra.mrb[0].mxu0 %v1092
        %v1198 = vpop.f32.mrb[0].mxu0
        %v1199 = vadd.f32 0.0, %v1198
        %v1200 = vpop.f32.mrb[0].mxu0
        %v1201 = vpop.f32.mrb[0].mxu0
        %v1202 = vadd.f32 0.0, %v1201
        %v1203 = vpop.f32.mrb[0].mxu0
        %1204 = vmatprep.mubr.bf16.mxu0 0
        %1205 = vmatmul.mubr.bf16.gmra.mrb[0].mxu0 %v1095
        %v1206 = vpop.f32.mrb[0].mxu0
        %v1207 = vadd.f32 0.0, %v1206
        %v1208 = vpop.f32.mrb[0].mxu0
        %v1209 = vpop.f32.mrb[0].mxu0
        %v1210 = vadd.f32 0.0, %v1209
        %v1211 = vpop.f32.mrb[0].mxu0
        %1212 = vmatprep.mubr.bf16.mxu0 0
        %1213 = vmatmul.mubr.bf16.gmra.mrb[0].mxu0 %v1098
        %v1214 = vpop.f32.mrb[0].mxu0
        %v1215 = vadd.f32 0.0, %v1214
        %v1216 = vpop.f32.mrb[0].mxu0
        %v1217 = vpop.f32.mrb[0].mxu0
        %v1218 = vadd.f32 0.0, %v1217
        %v1219 = vpop.f32.mrb[0].mxu0
        %1220 = vmatprep.mubr.bf16.mxu0 0
        %1221 = vmatmul.mubr.bf16.gmra.mrb[0].mxu0 %v1101
        %v1222 = vpop.f32.mrb[0].mxu0
        %v1223 = vadd.f32 0.0, %v1222
        %v1224 = vpop.f32.mrb[0].mxu0
        %v1225 = vpop.f32.mrb[0].mxu0
        %v1226 = vadd.f32 0.0, %v1225
        %v1227 = vpop.f32.mrb[0].mxu0
        %1228 = vmatprep.mubr.bf16.mxu0 0
        %1229 = vmatmul.mubr.bf16.gmra.mrb[0].mxu0 %v1104
        %v1230 = vpop.f32.mrb[0].mxu0
        %v1231 = vadd.f32 0.0, %v1230
        %v1232 = vpop.f32.mrb[0].mxu0
        %v1233 = vpop.f32.mrb[0].mxu0
        %v1234 = vadd.f32 0.0, %v1233
        %v1235 = vpop.f32.mrb[0].mxu0
        %1236 = vmatprep.mubr.bf16.mxu0 0
        %1237 = vmatmul.mubr.bf16.gmra.mrb[0].mxu0 %v1107
        %v1238 = vpop.f32.mrb[0].mxu0
        %v1239 = vadd.f32 0.0, %v1238
        %v1240 = vpop.f32.mrb[0].mxu0
        %v1241 = vpop.f32.mrb[0].mxu0
        %v1242 = vadd.f32 0.0, %v1241
        %v1243 = vpop.f32.mrb[0].mxu0
        %1244 = vmatprep.mubr.bf16.mxu0 0
        %1245 = vmatmul.mubr.bf16.gmra.mrb[0].mxu0 %v1110
        %v1246 = vpop.f32.mrb[0].mxu0
        %v1247 = vadd.f32 0.0, %v1246
        %v1248 = vpop.f32.mrb[0].mxu0
        %v1249 = vpop.f32.mrb[0].mxu0
        %v1250 = vadd.f32 0.0, %v1249
        %v1251 = vpop.f32.mrb[0].mxu0
        %1252 = vmatprep.mubr.bf16.mxu0 0
        %1253 = vmatmul.mubr.bf16.gmra.mrb[0].mxu0 %v1113
        %v1254 = vpop.f32.mrb[0].mxu0
        %v1255 = vadd.f32 0.0, %v1254
        %v1256 = vpop.f32.mrb[0].mxu0
        %v1257 = vpop.f32.mrb[0].mxu0
        %v1258 = vadd.f32 0.0, %v1257
        %v1259 = vpop.f32.mrb[0].mxu0
        %1260 = vmatprep.mubr.bf16.mxu0 0
        %1261 = vmatmul.mubr.bf16.gmra.mrb[0].mxu0 %v1116
        %v1262 = vpop.f32.mrb[0].mxu0
        %v1263 = vadd.f32 0.0, %v1262
        %v1264 = vpop.f32.mrb[0].mxu0
        %v1265 = vpop.f32.mrb[0].mxu0
        %v1266 = vadd.f32 0.0, %v1265
        %v1267 = vpop.f32.mrb[0].mxu0
        %1268 = vmatprep.mubr.bf16.mxu0 0
        %1269 = vmatmul.mubr.bf16.gmra.mrb[0].mxu0 %v1119
        %v1270 = vpop.f32.mrb[0].mxu0
        %v1271 = vadd.f32 0.0, %v1270
        %v1272 = vpop.f32.mrb[0].mxu0
        %v1273 = vpop.f32.mrb[0].mxu0
        %v1274 = vadd.f32 0.0, %v1273
        %v1275 = vpop.f32.mrb[0].mxu0
        %1276 = vmatprep.mubr.bf16.mxu0 0
        %1277 = vmatmul.mubr.bf16.gmra.mrb[0].mxu0 %v1122
        %v1278 = vpop.f32.mrb[0].mxu0
        %v1279 = vadd.f32 0.0, %v1278
        %v1280 = vpop.f32.mrb[0].mxu0
        %v1281 = vpop.f32.mrb[0].mxu0
        %v1282 = vadd.f32 0.0, %v1281
        %v1283 = vpop.f32.mrb[0].mxu0
        %1284 = vdwg.mxu0
        %v1285 = vrcp.pop %v934
        %v1286 = vrcp.pop %v937
        %v1287 = vrcp.pop %v940
        %v1288 = vrcp.pop %v943
        %v1289 = vrcp.pop %v946
        %v1290 = vrcp.pop %v949
        %v1291 = vrcp.pop %v952
        %v1292 = vrcp.pop %v955
        %v1293 = vrcp.pop %v958
        %v1294 = vrcp.pop %v961
        %v1295 = vrcp.pop %v964
        %v1296 = vrcp.pop %v967
        %v1297 = vrcp.pop %v970
        %v1298 = vrcp.pop %v973
        %v1299 = vrcp.pop %v976
        %v1300 = vrcp.pop %v979
        %v1301 = vrcp.pop %v982
        %v1302 = vrcp.pop %v985
        %v1303 = vrcp.pop %v988
        %v1304 = vrcp.pop %v991
        %v1305 = vrcp.pop %v994
        %v1306 = vrcp.pop %v997
        %v1307 = vrcp.pop %v1000
        %v1308 = vrcp.pop %v1003
        %v1309 = vrcp.pop %v1006
        %v1310 = vrcp.pop %v1009
        %v1311 = vrcp.pop %v1012
        %v1312 = vrcp.pop %v1015
        %v1313 = vrcp.pop %v1018
        %v1314 = vrcp.pop %v1021
        %v1315 = vrcp.pop %v1024
        %v1316 = vrcp.pop %v1027
        %v1317 = vmul.f32 %v1159, %v1285
        %v1318 = vmul.f32 %v1162, %v1286
        %v1319 = vmul.f32 %v1167, %v1287
        %v1320 = vmul.f32 %v1170, %v1288
        %v1321 = vmul.f32 %v1175, %v1289
        %v1322 = vmul.f32 %v1178, %v1290
        %v1323 = vmul.f32 %v1183, %v1291
        %v1324 = vmul.f32 %v1186, %v1292
        %v1325 = vmul.f32 %v1191, %v1293
        %v1326 = vmul.f32 %v1194, %v1294
        %v1327 = vmul.f32 %v1199, %v1295
        %v1328 = vmul.f32 %v1202, %v1296
        %v1329 = vmul.f32 %v1207, %v1297
        %v1330 = vmul.f32 %v1210, %v1298
        %v1331 = vmul.f32 %v1215, %v1299
        %v1332 = vmul.f32 %v1218, %v1300
        %v1333 = vmul.f32 %v1223, %v1301
        %v1334 = vmul.f32 %v1226, %v1302
        %v1335 = vmul.f32 %v1231, %v1303
        %v1336 = vmul.f32 %v1234, %v1304
        %v1337 = vmul.f32 %v1239, %v1305
        %v1338 = vmul.f32 %v1242, %v1306
        %v1339 = vmul.f32 %v1247, %v1307
        %v1340 = vmul.f32 %v1250, %v1308
        %v1341 = vmul.f32 %v1255, %v1309
        %v1342 = vmul.f32 %v1258, %v1310
        %v1343 = vmul.f32 %v1263, %v1311
        %v1344 = vmul.f32 %v1266, %v1312
        %v1345 = vmul.f32 %v1271, %v1313
        %v1346 = vmul.f32 %v1274, %v1314
        %v1347 = vmul.f32 %v1279, %v1315
        %v1348 = vmul.f32 %v1282, %v1316
        %v1349 = vld [vmem:[%s4] sm:$0x1]
        %v1351 = vlaneseq
        %v1352 = vshrl.u32 %v1351, 7
        %v1353 = vsub.s32 0, %v1352
        %v1354 = vrot.slane %v1349, %v1353
        %v1356 = vmul.f32 %v379, %v1354
        %v1357 = vmul.f32 %v380, %v1354
        %v1358 = vmul.f32 %v381, %v1354
        %v1359 = vmul.f32 %v382, %v1354
        %v1360 = vmul.f32 %v383, %v1354
        %v1361 = vmul.f32 %v384, %v1354
        %v1362 = vmul.f32 %v385, %v1354
        %v1363 = vmul.f32 %v386, %v1354
        %v1364 = vmul.f32 %v387, %v1354
        %v1365 = vmul.f32 %v388, %v1354
        %v1366 = vmul.f32 %v389, %v1354
        %v1367 = vmul.f32 %v390, %v1354
        %v1368 = vmul.f32 %v391, %v1354
        %v1369 = vmul.f32 %v392, %v1354
        %v1370 = vmul.f32 %v393, %v1354
        %v1371 = vmul.f32 %v394, %v1354
        %v1372 = vmul.f32 %v395, %v1354
        %v1373 = vmul.f32 %v396, %v1354
        %v1374 = vmul.f32 %v397, %v1354
        %v1375 = vmul.f32 %v398, %v1354
        %v1376 = vmul.f32 %v399, %v1354
        %v1377 = vmul.f32 %v400, %v1354
        %v1378 = vmul.f32 %v401, %v1354
        %v1379 = vmul.f32 %v402, %v1354
        %v1380 = vmul.f32 %v403, %v1354
        %v1381 = vmul.f32 %v404, %v1354
        %v1382 = vmul.f32 %v405, %v1354
        %v1383 = vmul.f32 %v406, %v1354
        %v1384 = vmul.f32 %v407, %v1354
        %v1385 = vmul.f32 %v408, %v1354
        %v1386 = vmul.f32 %v409, %v1354
        %v1387 = vmul.f32 %v410, %v1354
        %1388 = vadd.xlane.f32.xlu0 %v1356
        %v1389 = vpop.xlane.xlu0 %1388
        %1390 = vadd.xlane.f32.xlu0 %v1357
        %v1391 = vpop.xlane.xlu0 %1390
        %1392 = vadd.xlane.f32.xlu0 %v1358
        %v1393 = vpop.xlane.xlu0 %1392
        %1394 = vadd.xlane.f32.xlu0 %v1359
        %v1395 = vpop.xlane.xlu0 %1394
        %1396 = vadd.xlane.f32.xlu0 %v1360
        %v1397 = vpop.xlane.xlu0 %1396
        %1398 = vadd.xlane.f32.xlu0 %v1361
        %v1399 = vpop.xlane.xlu0 %1398
        %1400 = vadd.xlane.f32.xlu0 %v1362
        %v1401 = vpop.xlane.xlu0 %1400
        %1402 = vadd.xlane.f32.xlu0 %v1363
        %v1403 = vpop.xlane.xlu0 %1402
        %1404 = vadd.xlane.f32.xlu0 %v1364
        %v1405 = vpop.xlane.xlu0 %1404
        %1406 = vadd.xlane.f32.xlu0 %v1365
        %v1407 = vpop.xlane.xlu0 %1406
        %1408 = vadd.xlane.f32.xlu0 %v1366
        %v1409 = vpop.xlane.xlu0 %1408
        %1410 = vadd.xlane.f32.xlu0 %v1367
        %v1411 = vpop.xlane.xlu0 %1410
        %1412 = vadd.xlane.f32.xlu0 %v1368
        %v1413 = vpop.xlane.xlu0 %1412
        %1414 = vadd.xlane.f32.xlu0 %v1369
        %v1415 = vpop.xlane.xlu0 %1414
        %1416 = vadd.xlane.f32.xlu0 %v1370
        %v1417 = vpop.xlane.xlu0 %1416
        %1418 = vadd.xlane.f32.xlu0 %v1371
        %v1419 = vpop.xlane.xlu0 %1418
        %1420 = vadd.xlane.f32.xlu0 %v1372
        %v1421 = vpop.xlane.xlu0 %1420
        %1422 = vadd.xlane.f32.xlu0 %v1373
        %v1423 = vpop.xlane.xlu0 %1422
        %1424 = vadd.xlane.f32.xlu0 %v1374
        %v1425 = vpop.xlane.xlu0 %1424
        %1426 = vadd.xlane.f32.xlu0 %v1375
        %v1427 = vpop.xlane.xlu0 %1426
        %1428 = vadd.xlane.f32.xlu0 %v1376
        %v1429 = vpop.xlane.xlu0 %1428
        %1430 = vadd.xlane.f32.xlu0 %v1377
        %v1431 = vpop.xlane.xlu0 %1430
        %1432 = vadd.xlane.f32.xlu0 %v1378
        %v1433 = vpop.xlane.xlu0 %1432
        %1434 = vadd.xlane.f32.xlu0 %v1379
        %v1435 = vpop.xlane.xlu0 %1434
        %1436 = vadd.xlane.f32.xlu0 %v1380
        %v1437 = vpop.xlane.xlu0 %1436
        %1438 = vadd.xlane.f32.xlu0 %v1381
        %v1439 = vpop.xlane.xlu0 %1438
        %1440 = vadd.xlane.f32.xlu0 %v1382
        %v1441 = vpop.xlane.xlu0 %1440
        %1442 = vadd.xlane.f32.xlu0 %v1383
        %v1443 = vpop.xlane.xlu0 %1442
        %1444 = vadd.xlane.f32.xlu0 %v1384
        %v1445 = vpop.xlane.xlu0 %1444
        %1446 = vadd.xlane.f32.xlu0 %v1385
        %v1447 = vpop.xlane.xlu0 %1446
        %1448 = vadd.xlane.f32.xlu0 %v1386
        %v1449 = vpop.xlane.xlu0 %1448
        %1450 = vadd.xlane.f32.xlu0 %v1387
        %v1451 = vpop.xlane.xlu0 %1450
        %v1452 = vld [vmem:[#allocation2] sm:$0x1]
        %v1454 = vlaneseq
        %v1455 = vshrl.u32 %v1454, 7
        %v1456 = vsub.s32 0, %v1455
        %v1457 = vrot.slane %v1452, %v1456
        %v1459 = vadd.f32 %v1389, %v1457
        %v1460 = vadd.f32 %v1391, %v1457
        %v1461 = vadd.f32 %v1393, %v1457
        %v1462 = vadd.f32 %v1395, %v1457
        %v1463 = vadd.f32 %v1397, %v1457
        %v1464 = vadd.f32 %v1399, %v1457
        %v1465 = vadd.f32 %v1401, %v1457
        %v1466 = vadd.f32 %v1403, %v1457
        %v1467 = vadd.f32 %v1405, %v1457
        %v1468 = vadd.f32 %v1407, %v1457
        %v1469 = vadd.f32 %v1409, %v1457
        %v1470 = vadd.f32 %v1411, %v1457
        %v1471 = vadd.f32 %v1413, %v1457
        %v1472 = vadd.f32 %v1415, %v1457
        %v1473 = vadd.f32 %v1417, %v1457
        %v1474 = vadd.f32 %v1419, %v1457
        %v1475 = vadd.f32 %v1421, %v1457
        %v1476 = vadd.f32 %v1423, %v1457
        %v1477 = vadd.f32 %v1425, %v1457
        %v1478 = vadd.f32 %v1427, %v1457
        %v1479 = vadd.f32 %v1429, %v1457
        %v1480 = vadd.f32 %v1431, %v1457
        %v1481 = vadd.f32 %v1433, %v1457
        %v1482 = vadd.f32 %v1435, %v1457
        %v1483 = vadd.f32 %v1437, %v1457
        %v1484 = vadd.f32 %v1439, %v1457
        %v1485 = vadd.f32 %v1441, %v1457
        %v1486 = vadd.f32 %v1443, %v1457
        %v1487 = vadd.f32 %v1445, %v1457
        %v1488 = vadd.f32 %v1447, %v1457
        %v1489 = vadd.f32 %v1449, %v1457
        %v1490 = vadd.f32 %v1451, %v1457
        %v1491 = vxor.u32 %v1459, 2147483648
        %v1492 = vxor.u32 %v1460, 2147483648
        %v1493 = vxor.u32 %v1461, 2147483648
        %v1494 = vxor.u32 %v1462, 2147483648
        %v1495 = vxor.u32 %v1463, 2147483648
        %v1496 = vxor.u32 %v1464, 2147483648
        %v1497 = vxor.u32 %v1465, 2147483648
        %v1498 = vxor.u32 %v1466, 2147483648
        %v1499 = vxor.u32 %v1467, 2147483648
        %v1500 = vxor.u32 %v1468, 2147483648
        %v1501 = vxor.u32 %v1469, 2147483648
        %v1502 = vxor.u32 %v1470, 2147483648
        %v1503 = vxor.u32 %v1471, 2147483648
        %v1504 = vxor.u32 %v1472, 2147483648
        %v1505 = vxor.u32 %v1473, 2147483648
        %v1506 = vxor.u32 %v1474, 2147483648
        %v1507 = vxor.u32 %v1475, 2147483648
        %v1508 = vxor.u32 %v1476, 2147483648
        %v1509 = vxor.u32 %v1477, 2147483648
        %v1510 = vxor.u32 %v1478, 2147483648
        %v1511 = vxor.u32 %v1479, 2147483648
        %v1512 = vxor.u32 %v1480, 2147483648
        %v1513 = vxor.u32 %v1481, 2147483648
        %v1514 = vxor.u32 %v1482, 2147483648
        %v1515 = vxor.u32 %v1483, 2147483648
        %v1516 = vxor.u32 %v1484, 2147483648
        %v1517 = vxor.u32 %v1485, 2147483648
        %v1518 = vxor.u32 %v1486, 2147483648
        %v1519 = vxor.u32 %v1487, 2147483648
        %v1520 = vxor.u32 %v1488, 2147483648
        %v1521 = vxor.u32 %v1489, 2147483648
        %v1522 = vxor.u32 %v1490, 2147483648
        %v1523 = vmul.f32 %v1491, 1.442695
        %v1524 = vpow.pop %v1523
        %v1525 = vmul.f32 %v1492, 1.442695
        %v1526 = vpow.pop %v1525
        %v1527 = vmul.f32 %v1493, 1.442695
        %v1528 = vpow.pop %v1527
        %v1529 = vmul.f32 %v1494, 1.442695
        %v1530 = vpow.pop %v1529
        %v1531 = vmul.f32 %v1495, 1.442695
        %v1532 = vpow.pop %v1531
        %v1533 = vmul.f32 %v1496, 1.442695
        %v1534 = vpow.pop %v1533
        %v1535 = vmul.f32 %v1497, 1.442695
        %v1536 = vpow.pop %v1535
        %v1537 = vmul.f32 %v1498, 1.442695
        %v1538 = vpow.pop %v1537
        %v1539 = vmul.f32 %v1499, 1.442695
        %v1540 = vpow.pop %v1539
        %v1541 = vmul.f32 %v1500, 1.442695
        %v1542 = vpow.pop %v1541
        %v1543 = vmul.f32 %v1501, 1.442695
        %v1544 = vpow.pop %v1543
        %v1545 = vmul.f32 %v1502, 1.442695
        %v1546 = vpow.pop %v1545
        %v1547 = vmul.f32 %v1503, 1.442695
        %v1548 = vpow.pop %v1547
        %v1549 = vmul.f32 %v1504, 1.442695
        %v1550 = vpow.pop %v1549
        %v1551 = vmul.f32 %v1505, 1.442695
        %v1552 = vpow.pop %v1551
        %v1553 = vmul.f32 %v1506, 1.442695
        %v1554 = vpow.pop %v1553
        %v1555 = vmul.f32 %v1507, 1.442695
        %v1556 = vpow.pop %v1555
        %v1557 = vmul.f32 %v1508, 1.442695
        %v1558 = vpow.pop %v1557
        %v1559 = vmul.f32 %v1509, 1.442695
        %v1560 = vpow.pop %v1559
        %v1561 = vmul.f32 %v1510, 1.442695
        %v1562 = vpow.pop %v1561
        %v1563 = vmul.f32 %v1511, 1.442695
        %v1564 = vpow.pop %v1563
        %v1565 = vmul.f32 %v1512, 1.442695
        %v1566 = vpow.pop %v1565
        %v1567 = vmul.f32 %v1513, 1.442695
        %v1568 = vpow.pop %v1567
        %v1569 = vmul.f32 %v1514, 1.442695
        %v1570 = vpow.pop %v1569
        %v1571 = vmul.f32 %v1515, 1.442695
        %v1572 = vpow.pop %v1571
        %v1573 = vmul.f32 %v1516, 1.442695
        %v1574 = vpow.pop %v1573
        %v1575 = vmul.f32 %v1517, 1.442695
        %v1576 = vpow.pop %v1575
        %v1577 = vmul.f32 %v1518, 1.442695
        %v1578 = vpow.pop %v1577
        %v1579 = vmul.f32 %v1519, 1.442695
        %v1580 = vpow.pop %v1579
        %v1581 = vmul.f32 %v1520, 1.442695
        %v1582 = vpow.pop %v1581
        %v1583 = vmul.f32 %v1521, 1.442695
        %v1584 = vpow.pop %v1583
        %v1585 = vmul.f32 %v1522, 1.442695
        %v1586 = vpow.pop %v1585
        %v1587 = vadd.f32 %v1524, 1.0
        %v1588 = vadd.f32 %v1526, 1.0
        %v1589 = vadd.f32 %v1528, 1.0
        %v1590 = vadd.f32 %v1530, 1.0
        %v1591 = vadd.f32 %v1532, 1.0
        %v1592 = vadd.f32 %v1534, 1.0
        %v1593 = vadd.f32 %v1536, 1.0
        %v1594 = vadd.f32 %v1538, 1.0
        %v1595 = vadd.f32 %v1540, 1.0
        %v1596 = vadd.f32 %v1542, 1.0
        %v1597 = vadd.f32 %v1544, 1.0
        %v1598 = vadd.f32 %v1546, 1.0
        %v1599 = vadd.f32 %v1548, 1.0
        %v1600 = vadd.f32 %v1550, 1.0
        %v1601 = vadd.f32 %v1552, 1.0
        %v1602 = vadd.f32 %v1554, 1.0
        %v1603 = vadd.f32 %v1556, 1.0
        %v1604 = vadd.f32 %v1558, 1.0
        %v1605 = vadd.f32 %v1560, 1.0
        %v1606 = vadd.f32 %v1562, 1.0
        %v1607 = vadd.f32 %v1564, 1.0
        %v1608 = vadd.f32 %v1566, 1.0
        %v1609 = vadd.f32 %v1568, 1.0
        %v1610 = vadd.f32 %v1570, 1.0
        %v1611 = vadd.f32 %v1572, 1.0
        %v1612 = vadd.f32 %v1574, 1.0
        %v1613 = vadd.f32 %v1576, 1.0
        %v1614 = vadd.f32 %v1578, 1.0
        %v1615 = vadd.f32 %v1580, 1.0
        %v1616 = vadd.f32 %v1582, 1.0
        %v1617 = vadd.f32 %v1584, 1.0
        %v1618 = vadd.f32 %v1586, 1.0
        %v1619 = vrcp.pop %v1587
        %v1620 = vmul.f32 1.0, %v1619
        %v1621 = vrcp.pop %v1588
        %v1622 = vmul.f32 1.0, %v1621
        %v1623 = vrcp.pop %v1589
        %v1624 = vmul.f32 1.0, %v1623
        %v1625 = vrcp.pop %v1590
        %v1626 = vmul.f32 1.0, %v1625
        %v1627 = vrcp.pop %v1591
        %v1628 = vmul.f32 1.0, %v1627
        %v1629 = vrcp.pop %v1592
        %v1630 = vmul.f32 1.0, %v1629
        %v1631 = vrcp.pop %v1593
        %v1632 = vmul.f32 1.0, %v1631
        %v1633 = vrcp.pop %v1594
        %v1634 = vmul.f32 1.0, %v1633
        %v1635 = vrcp.pop %v1595
        %v1636 = vmul.f32 1.0, %v1635
        %v1637 = vrcp.pop %v1596
        %v1638 = vmul.f32 1.0, %v1637
        %v1639 = vrcp.pop %v1597
        %v1640 = vmul.f32 1.0, %v1639
        %v1641 = vrcp.pop %v1598
        %v1642 = vmul.f32 1.0, %v1641
        %v1643 = vrcp.pop %v1599
        %v1644 = vmul.f32 1.0, %v1643
        %v1645 = vrcp.pop %v1600
        %v1646 = vmul.f32 1.0, %v1645
        %v1647 = vrcp.pop %v1601
        %v1648 = vmul.f32 1.0, %v1647
        %v1649 = vrcp.pop %v1602
        %v1650 = vmul.f32 1.0, %v1649
        %v1651 = vrcp.pop %v1603
        %v1652 = vmul.f32 1.0, %v1651
        %v1653 = vrcp.pop %v1604
        %v1654 = vmul.f32 1.0, %v1653
        %v1655 = vrcp.pop %v1605
        %v1656 = vmul.f32 1.0, %v1655
        %v1657 = vrcp.pop %v1606
        %v1658 = vmul.f32 1.0, %v1657
        %v1659 = vrcp.pop %v1607
        %v1660 = vmul.f32 1.0, %v1659
        %v1661 = vrcp.pop %v1608
        %v1662 = vmul.f32 1.0, %v1661
        %v1663 = vrcp.pop %v1609
        %v1664 = vmul.f32 1.0, %v1663
        %v1665 = vrcp.pop %v1610
        %v1666 = vmul.f32 1.0, %v1665
        %v1667 = vrcp.pop %v1611
        %v1668 = vmul.f32 1.0, %v1667
        %v1669 = vrcp.pop %v1612
        %v1670 = vmul.f32 1.0, %v1669
        %v1671 = vrcp.pop %v1613
        %v1672 = vmul.f32 1.0, %v1671
        %v1673 = vrcp.pop %v1614
        %v1674 = vmul.f32 1.0, %v1673
        %v1675 = vrcp.pop %v1615
        %v1676 = vmul.f32 1.0, %v1675
        %v1677 = vrcp.pop %v1616
        %v1678 = vmul.f32 1.0, %v1677
        %v1679 = vrcp.pop %v1617
        %v1680 = vmul.f32 1.0, %v1679
        %v1681 = vrcp.pop %v1618
        %v1682 = vmul.f32 1.0, %v1681
        %v1683 = vsub.f32 1.0, %v1620
        %v1684 = vsub.f32 1.0, %v1622
        %v1685 = vsub.f32 1.0, %v1624
        %v1686 = vsub.f32 1.0, %v1626
        %v1687 = vsub.f32 1.0, %v1628
        %v1688 = vsub.f32 1.0, %v1630
        %v1689 = vsub.f32 1.0, %v1632
        %v1690 = vsub.f32 1.0, %v1634
        %v1691 = vsub.f32 1.0, %v1636
        %v1692 = vsub.f32 1.0, %v1638
        %v1693 = vsub.f32 1.0, %v1640
        %v1694 = vsub.f32 1.0, %v1642
        %v1695 = vsub.f32 1.0, %v1644
        %v1696 = vsub.f32 1.0, %v1646
        %v1697 = vsub.f32 1.0, %v1648
        %v1698 = vsub.f32 1.0, %v1650
        %v1699 = vsub.f32 1.0, %v1652
        %v1700 = vsub.f32 1.0, %v1654
        %v1701 = vsub.f32 1.0, %v1656
        %v1702 = vsub.f32 1.0, %v1658
        %v1703 = vsub.f32 1.0, %v1660
        %v1704 = vsub.f32 1.0, %v1662
        %v1705 = vsub.f32 1.0, %v1664
        %v1706 = vsub.f32 1.0, %v1666
        %v1707 = vsub.f32 1.0, %v1668
        %v1708 = vsub.f32 1.0, %v1670
        %v1709 = vsub.f32 1.0, %v1672
        %v1710 = vsub.f32 1.0, %v1674
        %v1711 = vsub.f32 1.0, %v1676
        %v1712 = vsub.f32 1.0, %v1678
        %v1713 = vsub.f32 1.0, %v1680
        %v1714 = vsub.f32 1.0, %v1682
        %1716 = vset.pattern.permute.xlu0 0
        %1717 = vperm.xlu0 %1716, %v1683
        %v1718 = vpop.permute.xlu0 %1717
        %1721 = vset.pattern.permute.xlu0 0
        %1722 = vperm.xlu0 %1721, %v1684
        %v1723 = vpop.permute.xlu0 %1722
        %1726 = vset.pattern.permute.xlu0 0
        %1727 = vperm.xlu0 %1726, %v1685
        %v1728 = vpop.permute.xlu0 %1727
        %1731 = vset.pattern.permute.xlu0 0
        %1732 = vperm.xlu0 %1731, %v1686
        %v1733 = vpop.permute.xlu0 %1732
        %1736 = vset.pattern.permute.xlu0 0
        %1737 = vperm.xlu0 %1736, %v1687
        %v1738 = vpop.permute.xlu0 %1737
        %1741 = vset.pattern.permute.xlu0 0
        %1742 = vperm.xlu0 %1741, %v1688
        %v1743 = vpop.permute.xlu0 %1742
        %1746 = vset.pattern.permute.xlu0 0
        %1747 = vperm.xlu0 %1746, %v1689
        %v1748 = vpop.permute.xlu0 %1747
        %1751 = vset.pattern.permute.xlu0 0
        %1752 = vperm.xlu0 %1751, %v1690
        %v1753 = vpop.permute.xlu0 %1752
        %1756 = vset.pattern.permute.xlu0 0
        %1757 = vperm.xlu0 %1756, %v1691
        %v1758 = vpop.permute.xlu0 %1757
        %1761 = vset.pattern.permute.xlu0 0
        %1762 = vperm.xlu0 %1761, %v1692
        %v1763 = vpop.permute.xlu0 %1762
        %1766 = vset.pattern.permute.xlu0 0
        %1767 = vperm.xlu0 %1766, %v1693
        %v1768 = vpop.permute.xlu0 %1767
        %1771 = vset.pattern.permute.xlu0 0
        %1772 = vperm.xlu0 %1771, %v1694
        %v1773 = vpop.permute.xlu0 %1772
        %1776 = vset.pattern.permute.xlu0 0
        %1777 = vperm.xlu0 %1776, %v1695
        %v1778 = vpop.permute.xlu0 %1777
        %1781 = vset.pattern.permute.xlu0 0
        %1782 = vperm.xlu0 %1781, %v1696
        %v1783 = vpop.permute.xlu0 %1782
        %1786 = vset.pattern.permute.xlu0 0
        %1787 = vperm.xlu0 %1786, %v1697
        %v1788 = vpop.permute.xlu0 %1787
        %1791 = vset.pattern.permute.xlu0 0
        %1792 = vperm.xlu0 %1791, %v1698
        %v1793 = vpop.permute.xlu0 %1792
        %1796 = vset.pattern.permute.xlu0 0
        %1797 = vperm.xlu0 %1796, %v1699
        %v1798 = vpop.permute.xlu0 %1797
        %1801 = vset.pattern.permute.xlu0 0
        %1802 = vperm.xlu0 %1801, %v1700
        %v1803 = vpop.permute.xlu0 %1802
        %1806 = vset.pattern.permute.xlu0 0
        %1807 = vperm.xlu0 %1806, %v1701
        %v1808 = vpop.permute.xlu0 %1807
        %1811 = vset.pattern.permute.xlu0 0
        %1812 = vperm.xlu0 %1811, %v1702
        %v1813 = vpop.permute.xlu0 %1812
        %1816 = vset.pattern.permute.xlu0 0
        %1817 = vperm.xlu0 %1816, %v1703
        %v1818 = vpop.permute.xlu0 %1817
        %1821 = vset.pattern.permute.xlu0 0
        %1822 = vperm.xlu0 %1821, %v1704
        %v1823 = vpop.permute.xlu0 %1822
        %1826 = vset.pattern.permute.xlu0 0
        %1827 = vperm.xlu0 %1826, %v1705
        %v1828 = vpop.permute.xlu0 %1827
        %1831 = vset.pattern.permute.xlu0 0
        %1832 = vperm.xlu0 %1831, %v1706
        %v1833 = vpop.permute.xlu0 %1832
        %1836 = vset.pattern.permute.xlu0 0
        %1837 = vperm.xlu0 %1836, %v1707
        %v1838 = vpop.permute.xlu0 %1837
        %1841 = vset.pattern.permute.xlu0 0
        %1842 = vperm.xlu0 %1841, %v1708
        %v1843 = vpop.permute.xlu0 %1842
        %1846 = vset.pattern.permute.xlu0 0
        %1847 = vperm.xlu0 %1846, %v1709
        %v1848 = vpop.permute.xlu0 %1847
        %1851 = vset.pattern.permute.xlu0 0
        %1852 = vperm.xlu0 %1851, %v1710
        %v1853 = vpop.permute.xlu0 %1852
        %1856 = vset.pattern.permute.xlu0 0
        %1857 = vperm.xlu0 %1856, %v1711
        %v1858 = vpop.permute.xlu0 %1857
        %1861 = vset.pattern.permute.xlu0 0
        %1862 = vperm.xlu0 %1861, %v1712
        %v1863 = vpop.permute.xlu0 %1862
        %1866 = vset.pattern.permute.xlu0 0
        %1867 = vperm.xlu0 %1866, %v1713
        %v1868 = vpop.permute.xlu0 %1867
        %1871 = vset.pattern.permute.xlu0 0
        %1872 = vperm.xlu0 %1871, %v1714
        %v1873 = vpop.permute.xlu0 %1872
        %v1875 = vmul.f32 %v1718, %v1317
        %v1876 = vmul.f32 %v1723, %v1318
        %v1877 = vmul.f32 %v1728, %v1319
        %v1878 = vmul.f32 %v1733, %v1320
        %v1879 = vmul.f32 %v1738, %v1321
        %v1880 = vmul.f32 %v1743, %v1322
        %v1881 = vmul.f32 %v1748, %v1323
        %v1882 = vmul.f32 %v1753, %v1324
        %v1883 = vmul.f32 %v1758, %v1325
        %v1884 = vmul.f32 %v1763, %v1326
        %v1885 = vmul.f32 %v1768, %v1327
        %v1886 = vmul.f32 %v1773, %v1328
        %v1887 = vmul.f32 %v1778, %v1329
        %v1888 = vmul.f32 %v1783, %v1330
        %v1889 = vmul.f32 %v1788, %v1331
        %v1890 = vmul.f32 %v1793, %v1332
        %v1891 = vmul.f32 %v1798, %v1333
        %v1892 = vmul.f32 %v1803, %v1334
        %v1893 = vmul.f32 %v1808, %v1335
        %v1894 = vmul.f32 %v1813, %v1336
        %v1895 = vmul.f32 %v1818, %v1337
        %v1896 = vmul.f32 %v1823, %v1338
        %v1897 = vmul.f32 %v1828, %v1339
        %v1898 = vmul.f32 %v1833, %v1340
        %v1899 = vmul.f32 %v1838, %v1341
        %v1900 = vmul.f32 %v1843, %v1342
        %v1901 = vmul.f32 %v1848, %v1343
        %v1902 = vmul.f32 %v1853, %v1344
        %v1903 = vmul.f32 %v1858, %v1345
        %v1904 = vmul.f32 %v1863, %v1346
        %v1905 = vmul.f32 %v1868, %v1347
        %v1906 = vmul.f32 %v1873, %v1348
        %1908 = vset.pattern.permute.xlu0 0
        %1909 = vperm.xlu0 %1908, %v1620
        %v1910 = vpop.permute.xlu0 %1909
        %1913 = vset.pattern.permute.xlu0 0
        %1914 = vperm.xlu0 %1913, %v1622
        %v1915 = vpop.permute.xlu0 %1914
        %1918 = vset.pattern.permute.xlu0 0
        %1919 = vperm.xlu0 %1918, %v1624
        %v1920 = vpop.permute.xlu0 %1919
        %1923 = vset.pattern.permute.xlu0 0
        %1924 = vperm.xlu0 %1923, %v1626
        %v1925 = vpop.permute.xlu0 %1924
        %1928 = vset.pattern.permute.xlu0 0
        %1929 = vperm.xlu0 %1928, %v1628
        %v1930 = vpop.permute.xlu0 %1929
        %1933 = vset.pattern.permute.xlu0 0
        %1934 = vperm.xlu0 %1933, %v1630
        %v1935 = vpop.permute.xlu0 %1934
        %1938 = vset.pattern.permute.xlu0 0
        %1939 = vperm.xlu0 %1938, %v1632
        %v1940 = vpop.permute.xlu0 %1939
        %1943 = vset.pattern.permute.xlu0 0
        %1944 = vperm.xlu0 %1943, %v1634
        %v1945 = vpop.permute.xlu0 %1944
        %1948 = vset.pattern.permute.xlu0 0
        %1949 = vperm.xlu0 %1948, %v1636
        %v1950 = vpop.permute.xlu0 %1949
        %1953 = vset.pattern.permute.xlu0 0
        %1954 = vperm.xlu0 %1953, %v1638
        %v1955 = vpop.permute.xlu0 %1954
        %1958 = vset.pattern.permute.xlu0 0
        %1959 = vperm.xlu0 %1958, %v1640
        %v1960 = vpop.permute.xlu0 %1959
        %1963 = vset.pattern.permute.xlu0 0
        %1964 = vperm.xlu0 %1963, %v1642
        %v1965 = vpop.permute.xlu0 %1964
        %1968 = vset.pattern.permute.xlu0 0
        %1969 = vperm.xlu0 %1968, %v1644
        %v1970 = vpop.permute.xlu0 %1969
        %1973 = vset.pattern.permute.xlu0 0
        %1974 = vperm.xlu0 %1973, %v1646
        %v1975 = vpop.permute.xlu0 %1974
        %1978 = vset.pattern.permute.xlu0 0
        %1979 = vperm.xlu0 %1978, %v1648
        %v1980 = vpop.permute.xlu0 %1979
        %1983 = vset.pattern.permute.xlu0 0
        %1984 = vperm.xlu0 %1983, %v1650
        %v1985 = vpop.permute.xlu0 %1984
        %1988 = vset.pattern.permute.xlu0 0
        %1989 = vperm.xlu0 %1988, %v1652
        %v1990 = vpop.permute.xlu0 %1989
        %1993 = vset.pattern.permute.xlu0 0
        %1994 = vperm.xlu0 %1993, %v1654
        %v1995 = vpop.permute.xlu0 %1994
        %1998 = vset.pattern.permute.xlu0 0
        %1999 = vperm.xlu0 %1998, %v1656
        %v2000 = vpop.permute.xlu0 %1999
        %2003 = vset.pattern.permute.xlu0 0
        %2004 = vperm.xlu0 %2003, %v1658
        %v2005 = vpop.permute.xlu0 %2004
        %2008 = vset.pattern.permute.xlu0 0
        %2009 = vperm.xlu0 %2008, %v1660
        %v2010 = vpop.permute.xlu0 %2009
        %2013 = vset.pattern.permute.xlu0 0
        %2014 = vperm.xlu0 %2013, %v1662
        %v2015 = vpop.permute.xlu0 %2014
        %2018 = vset.pattern.permute.xlu0 0
        %2019 = vperm.xlu0 %2018, %v1664
        %v2020 = vpop.permute.xlu0 %2019
        %2023 = vset.pattern.permute.xlu0 0
        %2024 = vperm.xlu0 %2023, %v1666
        %v2025 = vpop.permute.xlu0 %2024
        %2028 = vset.pattern.permute.xlu0 0
        %2029 = vperm.xlu0 %2028, %v1668
        %v2030 = vpop.permute.xlu0 %2029
        %2033 = vset.pattern.permute.xlu0 0
        %2034 = vperm.xlu0 %2033, %v1670
        %v2035 = vpop.permute.xlu0 %2034
        %2038 = vset.pattern.permute.xlu0 0
        %2039 = vperm.xlu0 %2038, %v1672
        %v2040 = vpop.permute.xlu0 %2039
        %2043 = vset.pattern.permute.xlu0 0
        %2044 = vperm.xlu0 %2043, %v1674
        %v2045 = vpop.permute.xlu0 %2044
        %2048 = vset.pattern.permute.xlu0 0
        %2049 = vperm.xlu0 %2048, %v1676
        %v2050 = vpop.permute.xlu0 %2049
        %2053 = vset.pattern.permute.xlu0 0
        %2054 = vperm.xlu0 %2053, %v1678
        %v2055 = vpop.permute.xlu0 %2054
        %2058 = vset.pattern.permute.xlu0 0
        %2059 = vperm.xlu0 %2058, %v1680
        %v2060 = vpop.permute.xlu0 %2059
        %2063 = vset.pattern.permute.xlu0 0
        %2064 = vperm.xlu0 %2063, %v1682
        %v2065 = vpop.permute.xlu0 %2064
        %v2067 = vmul.f32 %v1910, %v379
        %v2068 = vmul.f32 %v1915, %v380
        %v2069 = vmul.f32 %v1920, %v381
        %v2070 = vmul.f32 %v1925, %v382
        %v2071 = vmul.f32 %v1930, %v383
        %v2072 = vmul.f32 %v1935, %v384
        %v2073 = vmul.f32 %v1940, %v385
        %v2074 = vmul.f32 %v1945, %v386
        %v2075 = vmul.f32 %v1950, %v387
        %v2076 = vmul.f32 %v1955, %v388
        %v2077 = vmul.f32 %v1960, %v389
        %v2078 = vmul.f32 %v1965, %v390
        %v2079 = vmul.f32 %v1970, %v391
        %v2080 = vmul.f32 %v1975, %v392
        %v2081 = vmul.f32 %v1980, %v393
        %v2082 = vmul.f32 %v1985, %v394
        %v2083 = vmul.f32 %v1990, %v395
        %v2084 = vmul.f32 %v1995, %v396
        %v2085 = vmul.f32 %v2000, %v397
        %v2086 = vmul.f32 %v2005, %v398
        %v2087 = vmul.f32 %v2010, %v399
        %v2088 = vmul.f32 %v2015, %v400
        %v2089 = vmul.f32 %v2020, %v401
        %v2090 = vmul.f32 %v2025, %v402
        %v2091 = vmul.f32 %v2030, %v403
        %v2092 = vmul.f32 %v2035, %v404
        %v2093 = vmul.f32 %v2040, %v405
        %v2094 = vmul.f32 %v2045, %v406
        %v2095 = vmul.f32 %v2050, %v407
        %v2096 = vmul.f32 %v2055, %v408
        %v2097 = vmul.f32 %v2060, %v409
        %v2098 = vmul.f32 %v2065, %v410
        %v2099 = vadd.f32 %v1875, %v2067
        %v2100 = vadd.f32 %v1876, %v2068
        %v2101 = vadd.f32 %v1877, %v2069
        %v2102 = vadd.f32 %v1878, %v2070
        %v2103 = vadd.f32 %v1879, %v2071
        %v2104 = vadd.f32 %v1880, %v2072
        %v2105 = vadd.f32 %v1881, %v2073
        %v2106 = vadd.f32 %v1882, %v2074
        %v2107 = vadd.f32 %v1883, %v2075
        %v2108 = vadd.f32 %v1884, %v2076
        %v2109 = vadd.f32 %v1885, %v2077
        %v2110 = vadd.f32 %v1886, %v2078
        %v2111 = vadd.f32 %v1887, %v2079
        %v2112 = vadd.f32 %v1888, %v2080
        %v2113 = vadd.f32 %v1889, %v2081
        %v2114 = vadd.f32 %v1890, %v2082
        %v2115 = vadd.f32 %v1891, %v2083
        %v2116 = vadd.f32 %v1892, %v2084
        %v2117 = vadd.f32 %v1893, %v2085
        %v2118 = vadd.f32 %v1894, %v2086
        %v2119 = vadd.f32 %v1895, %v2087
        %v2120 = vadd.f32 %v1896, %v2088
        %v2121 = vadd.f32 %v1897, %v2089
        %v2122 = vadd.f32 %v1898, %v2090
        %v2123 = vadd.f32 %v1899, %v2091
        %v2124 = vadd.f32 %v1900, %v2092
        %v2125 = vadd.f32 %v1901, %v2093
        %v2126 = vadd.f32 %v1902, %v2094
        %v2127 = vadd.f32 %v1903, %v2095
        %v2128 = vadd.f32 %v1904, %v2096
        %v2129 = vadd.f32 %v1905, %v2097
        %v2130 = vadd.f32 %v1906, %v2098
        %2131 = vst [vmem:[%s330] sm:$0xff] %v2099
        %2132 = vst [vmem:[%s330 + $0x8] sm:$0xff] %v2100
        %2133 = vst [vmem:[%s330 + $0x10] sm:$0xff] %v2101
        %2134 = vst [vmem:[%s330 + $0x18] sm:$0xff] %v2102
        %2135 = vst [vmem:[%s330 + $0x20] sm:$0xff] %v2103
        %2136 = vst [vmem:[%s330 + $0x28] sm:$0xff] %v2104
        %2137 = vst [vmem:[%s330 + $0x30] sm:$0xff] %v2105
        %2138 = vst [vmem:[%s330 + $0x38] sm:$0xff] %v2106
        %2139 = vst [vmem:[%s330 + $0x40] sm:$0xff] %v2107
        %2140 = vst [vmem:[%s330 + $0x48] sm:$0xff] %v2108
        %2141 = vst [vmem:[%s330 + $0x50] sm:$0xff] %v2109
        %2142 = vst [vmem:[%s330 + $0x58] sm:$0xff] %v2110
        %2143 = vst [vmem:[%s330 + $0x60] sm:$0xff] %v2111
        %2144 = vst [vmem:[%s330 + $0x68] sm:$0xff] %v2112
        %2145 = vst [vmem:[%s330 + $0x70] sm:$0xff] %v2113
        %2146 = vst [vmem:[%s330 + $0x78] sm:$0xff] %v2114
        %2147 = vst [vmem:[%s330 + $0x80] sm:$0xff] %v2115
        %2148 = vst [vmem:[%s330 + $0x88] sm:$0xff] %v2116
        %2149 = vst [vmem:[%s330 + $0x90] sm:$0xff] %v2117
        %2150 = vst [vmem:[%s330 + $0x98] sm:$0xff] %v2118
        %2151 = vst [vmem:[%s330 + $0xa0] sm:$0xff] %v2119
        %2152 = vst [vmem:[%s330 + $0xa8] sm:$0xff] %v2120
        %2153 = vst [vmem:[%s330 + $0xb0] sm:$0xff] %v2121
        %2154 = vst [vmem:[%s330 + $0xb8] sm:$0xff] %v2122
        %2155 = vst [vmem:[%s330 + $0xc0] sm:$0xff] %v2123
        %2156 = vst [vmem:[%s330 + $0xc8] sm:$0xff] %v2124
        %2157 = vst [vmem:[%s330 + $0xd0] sm:$0xff] %v2125
        %2158 = vst [vmem:[%s330 + $0xd8] sm:$0xff] %v2126
        %2159 = vst [vmem:[%s330 + $0xe0] sm:$0xff] %v2127
        %2160 = vst [vmem:[%s330 + $0xe8] sm:$0xff] %v2128
        %2161 = vst [vmem:[%s330 + $0xf0] sm:$0xff] %v2129
        %2162 = vst [vmem:[%s330 + $0xf8] sm:$0xff] %v2130
        %s2163 = sand.u32 %s195, 1
        %s2164 = scalar_lea.sflag [#allocation5], %s2163
        %s2165 = sand.u32 %s195, 1
        %s2166 = smul.addr %s2165, 256
        %s2167 = scalar_lea.vmem [#allocation6], %s2166
        // Predicated region
        $region49: #{tpu_custom_call.1} parent=43 // pred_check
          %p2168 = pneg %p205
        $region50: #{tpu_custom_call.1} parent=43 // pred_check_branch
          %2170 = sbr.rel (%p2168) target = $region52
        $region51: #{tpu_custom_call.1} parent=43 // pred_region
          %s2171 = smul.u32 32, %s30
          %s2173 = ssub.s32 4096, 4096
          %2174 = vsyncadd %s2164, %s2173
          %s2175 = smul.addr %s29, 32
          %s2176 = sadd.s32 %s2171, %s2175
          %s2177 = smul.addr %s2176, 128
          %s2178 = scalar_lea.hbm %s6, %s2177
          %s2179 = sshll.u32 %s2167, 4
          %s2180 = int_to_ptr.vmem [resolvable:$true] %s2179
          %2185 = dma.vmem_to_hbm [thread:$0]  %s2180, 4096, %s2178, %s2164, 128, 128, 8
        $region52: #{tpu_custom_call.1} parent=43 // pred_fallthru
          _
      $region44: #{tpu_custom_call.1} parent=5 // pred_fallthru
        _
      %p2186 = scmp.le.s32.totalorder 2, %s20
      // Predicated region
      $region53: #{tpu_custom_call.1} parent=5 // pred_check
        %p2187 = pneg %p2186
      $region54: #{tpu_custom_call.1} parent=5 // pred_check_branch
        %2189 = sbr.rel (%p2187) target = $region56
      $region55: #{tpu_custom_call.1} parent=5 // pred_region
        %s2190 = ssub.s32 %s20, 2
        // Predicated region
        $region57: #{tpu_custom_call.1} parent=55 // pred_check
          %p2191 = pneg %p211
        $region58: #{tpu_custom_call.1} parent=55 // pred_check_branch
          %2193 = sbr.rel (%p2191) target = $region60
        $region59: #{tpu_custom_call.1} parent=55 // pred_region
          %s2194 = sand.u32 %s196, 1
          %s2195 = scalar_lea.sflag [#allocation5], %s2194
          %s2196 = sand.u32 %s196, 1
          %s2197 = smul.addr %s2196, 256
          %s2198 = scalar_lea.vmem [#allocation6], %s2197
          %2199 = dma.done %s2195, 4096
        $region60: #{tpu_custom_call.1} parent=55 // pred_fallthru
          _
      $region56: #{tpu_custom_call.1} parent=5 // pred_fallthru
        _
    $region6: #{tpu_custom_call.1} parent=1 // loop_footer
      %s24 = sadd.s32 1, %s20
    $region7: #{tpu_custom_call.1} parent=1 // loop_footer_branch
      %19 = sbr.rel target = $region3
    $region8: #{tpu_custom_call.1} parent=1 // loop_exit
      _
    %2200 = vsyncpa [#allocation4], 1
    %s2201 = scalar_lea.sflag [#allocation4], 1
    %2202 = vsyncpa %s2201, 1
    %2203 = vsyncpa [#allocation5], 1
    %s2204 = scalar_lea.sflag [#allocation5], 1
    %2205 = vsyncpa %s2204, 1

</llo_original>
